<compile_context>
chip_gen: v6e
topology: v6e:2x2x1
jax: 0.10.0
libtpu: 0.0.40
codegen_flags: <defaults>
</compile_context>

<pallas_src>
import functools

import jax
import jax.numpy as jnp
from jax.experimental import pallas as pl
from jax.experimental.pallas import tpu as pltpu


def _round_up(x, m):
    return (x + m - 1) // m * m


def _vmem_cap_bytes():
    """Per-chip scoped-VMEM cap with headroom (v7x: 64 MiB physical; v5e/v6e: 128)."""
    try:
        info = pltpu.get_tpu_info()
        cap = int(info.vmem_capacity_bytes)
    except Exception:
        cap = 64 * 1024 * 1024
    return max(cap - 16 * 1024 * 1024, 16 * 1024 * 1024)


def _est_vmem(chunk, rows, Hp, Wp, Cp):
    """Rough per-step VMEM working set of the PSROI kernel."""
    return (2 * chunk * Cp * 2                  # feature chunk, double-buffered bf16
            + 2 * (Hp + Wp) * chunk * 2         # Ey/Ex chunks, double-buffered bf16
            + 4 * rows * chunk * 4              # wy_hw / wx_hw / wmat temporaries
            + 2 * rows * Cp * 4                 # acc scratch + out block
            + 4 * rows * (Hp + Wp) * 2          # wy/wx row tables (double-buffered)
            + (2 << 20))                        # slack


# ---------------------------------------------------------------------------
# Deformable PSROI pooling kernel.
# grid = (roi_tile, hw_chunk): per step, expand the factored bilinear weights
# with two MXU one-hot matmuls and accumulate (wmat @ feature_chunk) into a
# resident f32 accumulator; store on the last chunk.
# ---------------------------------------------------------------------------
def _psroi_kernel(tile_bidx_ref, wy_ref, wx_ref, ey_ref, ex_ref, x_ref,
                  o_ref, acc_ref):
    del tile_bidx_ref  # only used inside the index_maps
    h = pl.program_id(1)

    @pl.when(h == 0)
    def _():
        acc_ref[...] = jnp.zeros_like(acc_ref)

    # (ROWS, Hp) x (Hp, HWc) and (ROWS, Wp) x (Wp, HWc) one-hot expansions (MXU)
    wy_hw = jnp.dot(wy_ref[...], ey_ref[...],
                    preferred_element_type=jnp.float32)
    wx_hw = jnp.dot(wx_ref[...], ex_ref[...],
                    preferred_element_type=jnp.float32)
    wmat = (wy_hw * wx_hw).astype(x_ref.dtype)          # 1 VPU mul + cast
    acc_ref[...] += jnp.dot(wmat, x_ref[0],
                            preferred_element_type=jnp.float32)

    @pl.when(h == pl.num_programs(1) - 1)
    def _():
        o_ref[...] = acc_ref[...].astype(o_ref.dtype)


def _psroi_pool(tile_bidx, wy_rows, wx_rows, ey, ex, x_flat, *,
                rows_per_tile, hw_chunk, out_dtype, vmem_limit):
    n_tiles = tile_bidx.shape[0]
    Hp = wy_rows.shape[1]
    Wp = wx_rows.shape[1]
    _, HW_pad, Cp = x_flat.shape
    n_chunks = HW_pad // hw_chunk

    grid_spec = pltpu.PrefetchScalarGridSpec(
        num_scalar_prefetch=1,
        grid=(n_tiles, n_chunks),
        in_specs=[
            pl.BlockSpec((rows_per_tile, Hp), lambda t, h, b: (t, 0)),
            pl.BlockSpec((rows_per_tile, Wp), lambda t, h, b: (t, 0)),
            pl.BlockSpec((Hp, hw_chunk), lambda t, h, b: (0, h)),
            pl.BlockSpec((Wp, hw_chunk), lambda t, h, b: (0, h)),
            # Feature chunk of the tile's image.  ROIs are batch-sorted, so with
            # a single chunk consecutive same-batch tiles skip this DMA.
            pl.BlockSpec((1, hw_chunk, Cp), lambda t, h, b: (b[t], h, 0)),
        ],
        out_specs=pl.BlockSpec((rows_per_tile, Cp), lambda t, h, b: (t, 0)),
        scratch_shapes=[pltpu.VMEM((rows_per_tile, Cp), jnp.float32)],
    )

    cp_kwargs = dict(dimension_semantics=("parallel", "arbitrary"))
    if vmem_limit is not None:
        cp_kwargs["vmem_limit_bytes"] = int(vmem_limit)

    return pl.pallas_call(
        _psroi_kernel,
        out_shape=jax.ShapeDtypeStruct((n_tiles * rows_per_tile, Cp), out_dtype),
        grid_spec=grid_spec,
        compiler_params=pltpu.CompilerParams(**cp_kwargs),
    )(tile_bidx, wy_rows, wx_rows, ey, ex, x_flat)


# ---------------------------------------------------------------------------
# Tiled linear (x @ W + b, optional ReLU) for the offset/mask FC head.
# ---------------------------------------------------------------------------
def _linear_kernel(x_ref, w_ref, b_ref, o_ref, acc_ref, *, relu):
    @pl.when(pl.program_id(2) == 0)
    def _():
        acc_ref[...] = jnp.zeros_like(acc_ref)

    acc_ref[...] += jnp.dot(x_ref[...], w_ref[...],
                            preferred_element_type=jnp.float32)

    @pl.when(pl.program_id(2) == pl.num_programs(2) - 1)
    def _():
        r = acc_ref[...] + b_ref[...]
        if relu:
            r = jnp.maximum(r, 0.0)
        o_ref[...] = r


def _linear(x, w, b, *, relu):
    """y = relu?(x @ w + b); bf16 operands, f32 accumulate, tiled over M/N/K."""
    M, K = x.shape
    _, N = w.shape
    tm = min(128, _round_up(M, 8))
    Mp = _round_up(M, tm)
    tn = min(512, _round_up(N, 128))
    Np = _round_up(N, tn)
    tk = min(512, _round_up(K, 128))
    Kp = _round_up(K, tk)

    xp = jnp.pad(x.astype(jnp.bfloat16), ((0, Mp - M), (0, Kp - K)))
    wp = jnp.pad(w.astype(jnp.bfloat16), ((0, Kp - K), (0, Np - N)))
    bp = jnp.pad(b.astype(jnp.float32).reshape(1, N), ((0, 0), (0, Np - N)))

    out = pl.pallas_call(
        functools.partial(_linear_kernel, relu=relu),
        out_shape=jax.ShapeDtypeStruct((Mp, Np), jnp.float32),
        grid_spec=pltpu.PrefetchScalarGridSpec(
            num_scalar_prefetch=0,
            grid=(Mp // tm, Np // tn, Kp // tk),
            in_specs=[pl.BlockSpec((tm, tk), lambda i, j, k: (i, k)),
                      pl.BlockSpec((tk, tn), lambda i, j, k: (k, j)),
                      # bias block index is K-invariant -> stays resident
                      pl.BlockSpec((1, tn), lambda i, j, k: (0, j))],
            out_specs=pl.BlockSpec((tm, tn), lambda i, j, k: (i, j)),
            scratch_shapes=[pltpu.VMEM((tm, tn), jnp.float32)]),
        compiler_params=pltpu.CompilerParams(
            dimension_semantics=("parallel", "parallel", "arbitrary")),
    )(xp, wp, bp)
    return out[:M, :N]


# ---------------------------------------------------------------------------
# Per-(roi, bin) factored bilinear weights built in the wrapper (cheap XLA).
# WY[r, y] / WX[r, x] each sum SPP sample terms; the SPP x SPP sample grid is a
# tensor product of y- and x-samples, so wmat = WY outer WX is exact.  The
# modulation-mask / 1/count scale is folded into WY.
# ---------------------------------------------------------------------------
def _build_bin_params(rois, off_x, off_y, mask, *, H, W, Hp, Wp, pooled_size,
                      sample_per_part, spatial_scale, trans_std):
    PS = pooled_size
    SPP = sample_per_part
    NB = PS * PS

    # CUDA uses round() (half away from zero); coords are >= 0 so
    # floor(x + 0.5) reproduces it.
    x1r = jnp.floor(rois[:, 1] + 0.5)
    y1r = jnp.floor(rois[:, 2] + 0.5)
    x2r = jnp.floor(rois[:, 3] + 0.5)
    y2r = jnp.floor(rois[:, 4] + 0.5)
    roi_start_w = x1r * spatial_scale - 0.5
    roi_start_h = y1r * spatial_scale - 0.5
    roi_end_w = (x2r + 1.0) * spatial_scale - 0.5
    roi_end_h = (y2r + 1.0) * spatial_scale - 0.5
    roi_w = jnp.maximum(roi_end_w - roi_start_w, 0.1)
    roi_h = jnp.maximum(roi_end_h - roi_start_h, 0.1)
    bin_w = roi_w / PS
    bin_h = roi_h / PS
    sub_w = bin_w / SPP
    sub_h = bin_h / SPP

    bins = jnp.arange(NB)
    pw = (bins % PS).astype(jnp.float32)[None, :]              # (1, NB)
    ph = (bins // PS).astype(jnp.float32)[None, :]

    trans_x = off_x * trans_std                                 # (n, NB)
    trans_y = off_y * trans_std
    wstart = pw * bin_w[:, None] + roi_start_w[:, None] + trans_x * roi_w[:, None]
    hstart = ph * bin_h[:, None] + roi_start_h[:, None] + trans_y * roi_h[:, None]

    smp = jnp.arange(SPP, dtype=jnp.float32)                    # (SPP,)
    w = wstart[..., None] + smp * sub_w[:, None, None]          # (n, NB, SPP)
    h = hstart[..., None] + smp * sub_h[:, None, None]

    vx = ((w >= -0.5) & (w <= W - 0.5)).astype(jnp.float32)
    vy = ((h >= -0.5) & (h <= H - 0.5)).astype(jnp.float32)
    wc = jnp.clip(w, 0.0, W - 1.0)
    hc = jnp.clip(h, 0.0, H - 1.0)

    x1 = jnp.floor(wc)
    dx = wc - x1
    x2 = jnp.ceil(wc)
    y1 = jnp.floor(hc)
    dy = hc - y1
    y2 = jnp.ceil(hc)

    oh = functools.partial(jax.nn.one_hot, dtype=jnp.float32)
    WY = ((vy * (1.0 - dy))[..., None] * oh(y1.astype(jnp.int32), Hp)
          + (vy * dy)[..., None] * oh(y2.astype(jnp.int32), Hp)).sum(axis=2)
    WX = ((vx * (1.0 - dx))[..., None] * oh(x1.astype(jnp.int32), Wp)
          + (vx * dx)[..., None] * oh(x2.astype(jnp.int32), Wp)).sum(axis=2)

    cnt = vy.sum(-1) * vx.sum(-1)                               # (n, NB)
    scale = mask * jnp.where(cnt > 0.0, 1.0 / cnt, 0.0)
    WY = WY * scale[..., None]                                  # fold scale into WY
    return WY, WX                                               # (n, NB, Hp/Wp)


class DCNPooling:
    """JAX/Pallas port of DCNv2 DCNPooling forward."""

    def __init__(self, spatial_scale, pooled_size, output_dim, no_trans,
                 group_size=1, part_size=None, sample_per_part=4,
                 trans_std=0.0, deform_fc_dim=1024, key=None,
                 feature_dtype=jnp.bfloat16):
        self.spatial_scale = float(spatial_scale)
        self.pooled_size = int(pooled_size)
        self.output_dim = int(output_dim)
        self.no_trans = bool(no_trans)
        self.group_size = int(group_size)
        self.part_size = self.pooled_size if part_size is None else int(part_size)
        self.sample_per_part = int(sample_per_part)
        self.trans_std = float(trans_std)
        self.deform_fc_dim = int(deform_fc_dim)
        self.feature_dtype = feature_dtype
        assert self.group_size == 1
        assert self.part_size == self.pooled_size

        if not self.no_trans:
            if key is None:
                key = jax.random.PRNGKey(0)
            ps = self.pooled_size
            fin = ps * ps * self.output_dim
            d = self.deform_fc_dim
            dout = 3 * ps * ps
            k1, k2, k3, k4 = jax.random.split(key, 4)
            lim1 = fin ** -0.5
            lim2 = d ** -0.5
            # weights stored transposed as (in, out) for x @ W
            self.w1 = jax.random.uniform(k1, (fin, d), jnp.float32, -lim1, lim1)
            self.b1 = jax.random.uniform(k2, (d,), jnp.float32, -lim1, lim1)
            self.w2 = jax.random.uniform(k3, (d, d), jnp.float32, -lim2, lim2)
            self.b2 = jax.random.uniform(k4, (d,), jnp.float32, -lim2, lim2)
            # last layer zero-initialized, as in the PyTorch module
            self.w3 = jnp.zeros((d, dout), jnp.float32)
            self.b3 = jnp.zeros((dout,), jnp.float32)

    def __call__(self, x_nchw, rois):
        B, C, H, W = x_nchw.shape
        assert C == self.output_dim
        n = rois.shape[0]
        PS = self.pooled_size
        SPP = self.sample_per_part
        NB = PS * PS

        NB_PAD = _round_up(NB, 8)                  # bins rows per roi (padded)
        R_TILE = max(1, 256 // NB_PAD)             # rois per grid step (ROWS~256)
        ROWS = R_TILE * NB_PAD                     # matmul M per grid step
        N_PAD = _round_up(n + B * (R_TILE - 1), R_TILE)
        n_tiles = N_PAD // R_TILE
        N_ROWS = N_PAD * NB_PAD

        Hp = _round_up(H, 8)
        Wp = _round_up(W, 8)
        Cp = _round_up(C, 128)                     # lane-dense channels / MXU N
        HW = H * W

        # --- HW chunking + per-chip VMEM sizing --------------------------------
        vmem_cap = _vmem_cap_bytes()
        work_budget = min(24 << 20, vmem_cap)
        hw_chunk = _round_up(HW, 128)
        while hw_chunk > 128 and _est_vmem(hw_chunk, ROWS, Hp, Wp, Cp) > work_budget:
            hw_chunk = max(128, _round_up(hw_chunk // 2, 128))
        HW_pad = _round_up(HW, hw_chunk)

        est = _est_vmem(hw_chunk, ROWS, Hp, Wp, Cp)
        vmem_limit = None
        if est > (16 << 20):
            vmem_limit = int(min(max(est + (4 << 20), 32 << 20), vmem_cap))

        # --- features: NCHW -> (B, HW_pad, Cp), lane-dense padded channels -----
        x_flat = jnp.transpose(x_nchw, (0, 2, 3, 1)).reshape(B, HW, C)
        x_flat = jnp.pad(x_flat, ((0, 0), (0, HW_pad - HW), (0, Cp - C)))
        x_flat = x_flat.astype(self.feature_dtype)

        # Constant one-hot expansion matrices (row/col index -> pixel index).
        pidx = jnp.arange(HW_pad, dtype=jnp.int32)
        pvalid = pidx < HW
        ey = ((pidx[None, :] // W == jnp.arange(Hp, dtype=jnp.int32)[:, None])
              & pvalid[None, :]).astype(jnp.bfloat16)           # (Hp, HW_pad)
        ex = ((pidx[None, :] % W == jnp.arange(Wp, dtype=jnp.int32)[:, None])
              & pvalid[None, :]).astype(jnp.bfloat16)           # (Wp, HW_pad)

        # --- sort ROIs by batch and pack into batch-aligned tiles --------------
        rois_f = rois.astype(jnp.float32)
        batch_idx = jnp.clip(rois_f[:, 0].astype(jnp.int32), 0, B - 1)
        order = jnp.argsort(batch_idx)
        b_sorted = batch_idx[order]
        rois_sorted = rois_f[order]

        counts = jnp.bincount(batch_idx, length=B).astype(jnp.int32)
        padded_counts = ((counts + R_TILE - 1) // R_TILE) * R_TILE
        csum = jnp.cumsum(padded_counts)
        starts = csum - padded_counts
        excl = jnp.cumsum(counts) - counts
        rank = jnp.arange(n, dtype=jnp.int32) - excl[b_sorted]
        dest = starts[b_sorted] + rank                 # padded slot per roi

        # Per-tile batch index; trailing all-padding tiles reuse the last real
        # image's slab so no extra feature DMA is issued at the end of the grid.
        tile_start = jnp.arange(n_tiles, dtype=jnp.int32) * R_TILE
        tile_b = jnp.searchsorted(csum, tile_start, side="right").astype(jnp.int32)
        last_b = b_sorted[n - 1] if n > 0 else jnp.zeros((), jnp.int32)
        tile_bidx = jnp.where(tile_b >= B, last_b, tile_b).astype(jnp.int32)

        row_idx = (dest[:, None] * NB_PAD
                   + jnp.arange(NB, dtype=jnp.int32)[None, :])     # (n, NB)

        build = functools.partial(
            _build_bin_params, H=H, W=W, Hp=Hp, Wp=Wp, pooled_size=PS,
            sample_per_part=SPP, spatial_scale=self.spatial_scale,
            trans_std=self.trans_std)

        def run_pool(off_x, off_y, mask, out_dtype):
            wy, wx = build(rois_sorted, off_x, off_y, mask)        # (n, NB, Hp/Wp)
            flat_idx = row_idx.reshape(-1)
            wy_rows = jnp.zeros((N_ROWS, Hp), jnp.bfloat16).at[flat_idx].set(
                wy.reshape(n * NB, Hp).astype(jnp.bfloat16))
            wx_rows = jnp.zeros((N_ROWS, Wp), jnp.bfloat16).at[flat_idx].set(
                wx.reshape(n * NB, Wp).astype(jnp.bfloat16))
            out_rows = _psroi_pool(tile_bidx, wy_rows, wx_rows, ey, ex, x_flat,
                                   rows_per_tile=ROWS, hw_chunk=hw_chunk,
                                   out_dtype=out_dtype, vmem_limit=vmem_limit)
            return out_rows[row_idx][..., :C]                      # (n, NB, C)

        zeros_nb = jnp.zeros((n, NB), jnp.float32)
        ones_nb = jnp.ones((n, NB), jnp.float32)

        if self.no_trans:
            out_sorted = run_pool(zeros_nb, zeros_nb, ones_nb, jnp.float32)
        else:
            # pass 1: plain PSROI pooling feeding the offset/mask FC head (bf16)
            roi_feat = run_pool(zeros_nb, zeros_nb, ones_nb, jnp.bfloat16)
            # match torch roi.view(n, -1) ordering: channel-major
            flat = jnp.transpose(roi_feat, (0, 2, 1)).reshape(n, C * NB)
            h1 = _linear(flat, self.w1, self.b1, relu=True)
            h2 = _linear(h1, self.w2, self.b2, relu=True)
            om = _linear(h2, self.w3, self.b3, relu=False)         # (n, 3*NB)
            off_x = om[:, 0:NB]
            off_y = om[:, NB:2 * NB]
            mask = jax.nn.sigmoid(om[:, 2 * NB:3 * NB])
            # pass 2: deformable pooling modulated by the mask
            out_sorted = run_pool(off_x, off_y, mask, jnp.float32)

        # restore original roi order and reshape to (n, C, ps, ps)
        out = jnp.zeros_like(out_sorted).at[order].set(out_sorted)
        return jnp.transpose(out.reshape(n, PS, PS, C), (0, 3, 1, 2))


if __name__ == "__main__":
    key = jax.random.PRNGKey(0)
    kx, kp = jax.random.split(key)

    B, C, H, W = 2, 4, 16, 16
    pooled_size = 4
    module = DCNPooling(spatial_scale=0.25, pooled_size=pooled_size,
                        output_dim=C, no_trans=False, group_size=1,
                        part_size=None, sample_per_part=2, trans_std=0.1,
                        deform_fc_dim=128, key=kp)

    x = jax.random.normal(kx, (B, C, H, W), dtype=jnp.float32)
    rois = jnp.array([[0.0, 4.0, 4.0, 40.0, 40.0],
                      [1.0, 8.0, 12.0, 52.0, 44.0],
                      [0.0, 0.0, 0.0, 60.0, 60.0]], dtype=jnp.float32)

    out = module(x, rois)
    out = jax.block_until_ready(out)

    assert out.shape == (rois.shape[0], C, pooled_size, pooled_size), out.shape
    assert bool(jnp.all(jnp.isfinite(out)))
    print("KERNEL_OK")
</pallas_src>

<mosaic_0001>
module attributes {stable_mosaic.version = 11 : i64} {
  func.func @_psroi_kernel(%arg0: i32, %arg1: i32, %arg2: memref<3xi32, #tpu.memory_space<smem>>, %arg3: memref<256x16xbf16, #tpu.memory_space<vmem>>, %arg4: memref<256x16xbf16, #tpu.memory_space<vmem>>, %arg5: memref<16x256xbf16, #tpu.memory_space<vmem>>, %arg6: memref<16x256xbf16, #tpu.memory_space<vmem>>, %arg7: memref<1x256x128xbf16, #tpu.memory_space<vmem>>, %arg8: memref<256x128xbf16, #tpu.memory_space<vmem>>, %arg9: memref<256x128xf32, #tpu.memory_space<vmem>>) attributes {dimension_semantics = [#tpu.dimension_semantics<parallel>, #tpu.dimension_semantics<arbitrary>], iteration_bounds = array<i64: 3, 1>, scalar_prefetch = 1 : i64, scratch_operands = 1 : i64, tpu.core_type = #tpu.core_type<tc>, window_params = [{transform_indices = @transform_0, window_bounds = array<i64: 256, 16>}, {transform_indices = @transform_1, window_bounds = array<i64: 256, 16>}, {transform_indices = @transform_2, window_bounds = array<i64: 16, 256>}, {transform_indices = @transform_3, window_bounds = array<i64: 16, 256>}, {transform_indices = @transform_4, window_bounds = array<i64: 1, 256, 128>}, {transform_indices = @transform_5, window_bounds = array<i64: 256, 128>}]} {
    %c0_i32 = arith.constant 0 : i32
    %0 = arith.cmpi eq, %arg1, %c0_i32 : i32
    %1 = arith.extui %0 : i1 to i32
    %c0_i32_0 = arith.constant 0 : i32
    %2 = arith.cmpi ne, %1, %c0_i32_0 : i32
    scf.if %2 {
      %cst_19 = arith.constant 0.000000e+00 : f32
      %20 = vector.broadcast %cst_19 : f32 to vector<256x128xf32>
      %c0_20 = arith.constant 0 : index
      %c0_21 = arith.constant 0 : index
      %21 = vector.load %arg9[%c0_20, %c0_21] : memref<256x128xf32, #tpu.memory_space<vmem>>, vector<256x128xf32>
      tpu.vector_store %arg9[%c0_20, %c0_21], %20 {strides = array<i32>} : memref<256x128xf32, #tpu.memory_space<vmem>>, vector<256x128xf32>,
    } else {
    }
    %c0 = arith.constant 0 : index
    %c0_1 = arith.constant 0 : index
    %3 = vector.load %arg3[%c0, %c0_1] : memref<256x16xbf16, #tpu.memory_space<vmem>>, vector<256x16xbf16>
    %c0_2 = arith.constant 0 : index
    %c0_3 = arith.constant 0 : index
    %4 = vector.load %arg5[%c0_2, %c0_3] : memref<16x256xbf16, #tpu.memory_space<vmem>>, vector<16x256xbf16>
    %cst = arith.constant dense<0.000000e+00> : vector<256x256xf32>
    %5 = tpu.matmul %3, %4, %cst {dimension_numbers = #tpu.dot_dimension_numbers<[1], [0], [0], [1], [0, 0, 1, 1], [], []>} : vector<256x16xbf16>, vector<16x256xbf16>, vector<256x256xf32> -> vector<256x256xf32>
    %c0_4 = arith.constant 0 : index
    %c0_5 = arith.constant 0 : index
    %6 = vector.load %arg4[%c0_4, %c0_5] : memref<256x16xbf16, #tpu.memory_space<vmem>>, vector<256x16xbf16>
    %c0_6 = arith.constant 0 : index
    %c0_7 = arith.constant 0 : index
    %7 = vector.load %arg6[%c0_6, %c0_7] : memref<16x256xbf16, #tpu.memory_space<vmem>>, vector<16x256xbf16>
    %cst_8 = arith.constant dense<0.000000e+00> : vector<256x256xf32>
    %8 = tpu.matmul %6, %7, %cst_8 {dimension_numbers = #tpu.dot_dimension_numbers<[1], [0], [0], [1], [0, 0, 1, 1], [], []>} : vector<256x16xbf16>, vector<16x256xbf16>, vector<256x256xf32> -> vector<256x256xf32>
    %9 = arith.mulf %5, %8 : vector<256x256xf32>
    %10 = arith.truncf %9 : vector<256x256xf32> to vector<256x256xbf16>
    %c0_9 = arith.constant 0 : index
    %c0_10 = arith.constant 0 : index
    %11 = vector.load %arg9[%c0_9, %c0_10] : memref<256x128xf32, #tpu.memory_space<vmem>>, vector<256x128xf32>
    %c0_11 = arith.constant 0 : index
    %c0_12 = arith.constant 0 : index
    %c0_13 = arith.constant 0 : index
    %12 = vector.load %arg7[%c0_11, %c0_12, %c0_13] : memref<1x256x128xbf16, #tpu.memory_space<vmem>>, vector<1x256x128xbf16>
    %13 = vector.shape_cast %12 : vector<1x256x128xbf16> to vector<256x128xbf16>
    %cst_14 = arith.constant dense<0.000000e+00> : vector<256x128xf32>
    %14 = tpu.matmul %10, %13, %cst_14 {dimension_numbers = #tpu.dot_dimension_numbers<[1], [0], [0], [1], [0, 0, 1, 1], [], []>} : vector<256x256xbf16>, vector<256x128xbf16>, vector<256x128xf32> -> vector<256x128xf32>
    %15 = arith.addf %11, %14 : vector<256x128xf32>
    %c0_15 = arith.constant 0 : index
    %c0_16 = arith.constant 0 : index
    %16 = vector.load %arg9[%c0_15, %c0_16] : memref<256x128xf32, #tpu.memory_space<vmem>>, vector<256x128xf32>
    tpu.vector_store %arg9[%c0_15, %c0_16], %15 {strides = array<i32>} : memref<256x128xf32, #tpu.memory_space<vmem>>, vector<256x128xf32>,
    %c0_i32_17 = arith.constant 0 : i32
    %17 = arith.cmpi eq, %arg1, %c0_i32_17 : i32
    %18 = arith.extui %17 : i1 to i32
    %c0_i32_18 = arith.constant 0 : i32
    %19 = arith.cmpi ne, %18, %c0_i32_18 : i32
    scf.if %19 {
      %c0_19 = arith.constant 0 : index
      %c0_20 = arith.constant 0 : index
      %20 = vector.load %arg9[%c0_19, %c0_20] : memref<256x128xf32, #tpu.memory_space<vmem>>, vector<256x128xf32>
      %21 = arith.truncf %20 : vector<256x128xf32> to vector<256x128xbf16>
      %c0_21 = arith.constant 0 : index
      %c0_22 = arith.constant 0 : index
      %22 = vector.load %arg8[%c0_21, %c0_22] : memref<256x128xbf16, #tpu.memory_space<vmem>>, vector<256x128xbf16>
      tpu.vector_store %arg8[%c0_21, %c0_22], %21 {strides = array<i32>} : memref<256x128xbf16, #tpu.memory_space<vmem>>, vector<256x128xbf16>,
    } else {
    }
    return
  }
  func.func @transform_0(%arg0: i32, %arg1: i32, %arg2: memref<3xi32, #tpu.memory_space<smem>>) -> (i32, i32) {
    %c0_i32 = arith.constant 0 : i32
    %c0_i32_0 = arith.constant 0 : i32
    return %arg0, %c0_i32 : i32, i32
  }
  func.func @transform_1(%arg0: i32, %arg1: i32, %arg2: memref<3xi32, #tpu.memory_space<smem>>) -> (i32, i32) {
    %c0_i32 = arith.constant 0 : i32
    %c0_i32_0 = arith.constant 0 : i32
    return %arg0, %c0_i32 : i32, i32
  }
  func.func @transform_2(%arg0: i32, %arg1: i32, %arg2: memref<3xi32, #tpu.memory_space<smem>>) -> (i32, i32) {
    %c0_i32 = arith.constant 0 : i32
    %c0_i32_0 = arith.constant 0 : i32
    return %c0_i32, %arg1 : i32, i32
  }
  func.func @transform_3(%arg0: i32, %arg1: i32, %arg2: memref<3xi32, #tpu.memory_space<smem>>) -> (i32, i32) {
    %c0_i32 = arith.constant 0 : i32
    %c0_i32_0 = arith.constant 0 : i32
    return %c0_i32, %arg1 : i32, i32
  }
  func.func @transform_4(%arg0: i32, %arg1: i32, %arg2: memref<3xi32, #tpu.memory_space<smem>>) -> (i32, i32, i32) {
    %0 = arith.index_cast %arg0 : i32 to index
    %1 = memref.load %arg2[%0] : memref<3xi32, #tpu.memory_space<smem>>
    %c0_i32 = arith.constant 0 : i32
    %c0_i32_0 = arith.constant 0 : i32
    return %1, %arg1, %c0_i32 : i32, i32, i32
  }
  func.func @transform_5(%arg0: i32, %arg1: i32, %arg2: memref<3xi32, #tpu.memory_space<smem>>) -> (i32, i32) {
    %c0_i32 = arith.constant 0 : i32
    %c0_i32_0 = arith.constant 0 : i32
    return %arg0, %c0_i32 : i32, i32
  }
}

</mosaic_0001>

<llo_original>
// kernel: tpu_custom_call.1
$region0: #{tpu_custom_call.1}
  #allocation0 [shape = 'u32[]', space=smem, size = 0x4, offset = 0x4, fixed_abs, tag = 'smem constant byte address 0x4 - core index']
  #allocation1 [shape = 'u32[144,128]{1,0:T(1,128)}', space=vmem, size = 0x12000, scoped, tag = 'internal scratch']
  #allocation2 [shape = 'f32[256,128]{1,0:T(8,128)}', space=vmem, size = 0x20000, scoped, tag = 'scratch operand']
  #allocation3 [shape = 's32[1]{0}', space=sflag, size = 0x4, scoped, tag = 'scoped memory for tpu_custom_call.1']
  #allocation4 [shape = 'u8[512]{0}', space=smem, size = 0x200, scoped, tag = 'prefetched SMEM operand 0']
  %s0 = inlined_call_operand.vmem [shape: s32[3], index: 0, kind: input, shape index: {}]
  %s1 = inlined_call_operand.vmem [shape: bf16[768,16], index: 1, kind: input, shape index: {}]
  %s2 = inlined_call_operand.vmem [shape: bf16[768,16], index: 2, kind: input, shape index: {}]
  %s3 = inlined_call_operand.vmem [shape: bf16[16,256], index: 3, kind: input, shape index: {}]
  %s4 = inlined_call_operand.vmem [shape: bf16[16,256], index: 4, kind: input, shape index: {}]
  %s5 = inlined_call_operand.vmem [shape: bf16[2,256,128], index: 5, kind: input, shape index: {}]
  %s6 = inlined_call_operand.hbm [shape: bf16[768,128], index: 6, kind: output, shape index: {}]
  %s7 = sld [smem:[#allocation0]]
  $region61: #{tpu_custom_call.1} parent=0
    _
  %s9 = ssub.s32 1, %s7
  %s10 = scalar_select 0, %s9, %s7
  %s11 = sshll.u32 %s0, 4
  %s12 = int_to_ptr.vmem [resolvable:$true] %s11
  %14 = dma.vmem_to_smem %s12, 16, [#allocation4], [#allocation3]
  %15 = dma.done [#allocation3], 16
  %16 = sfence
  $region1: #{tpu_custom_call.1} parent=0
    #allocation5 [shape = 'u8[131072]{0}', space=vmem, size = 0x20000, scoped, tag = 'output window, operand 0']
    #allocation6 [shape = 's32[2]{0}', space=sflag, size = 0x8, scoped, tag = 'scoped memory for tpu_custom_call.1']
    %17 = vsyncpa [#allocation6], 0
    %s18 = scalar_lea.sflag [#allocation6], 1
    %19 = vsyncpa %s18, 0
    loop: start=0, step=1, limit=5
    $region2: #{tpu_custom_call.1} parent=1 // loop_pre_header
      _
    $region3: #{tpu_custom_call.1} parent=1 // loop_header
      %s21 = sphi 0, %s25
      %p22 = scmp.ge.s32.totalorder %s21, 5
      %s28 = sphi 0, %s40
      %s29 = sphi 0, %s36
      %s30 = sphi 0, %s28
      %s31 = sphi 0, %s29
      %s32 = sphi 0, %s30
      %s33 = sphi 0, %s31
      %s43 = sphi 0, %s45
      %s46 = sphi 0, %s43
      %s47 = sphi 0, %s46
      %s63 = sphi 0, %s47
      %s69 = sphi 0, %s71
      %s72 = sphi 0, %s69
      %s73 = sphi 0, %s72
      %s89 = sphi 0, %s73
      %s95 = sphi 0, %s97
      %s98 = sphi 0, %s95
      %s99 = sphi 0, %s98
      %s115 = sphi 0, %s99
      %s121 = sphi 0, %s123
      %s124 = sphi 0, %s121
      %s125 = sphi 0, %s124
      %s141 = sphi 0, %s125
      %s151 = sphi 0, %s153
      %s154 = sphi 0, %s151
      %s155 = sphi 0, %s154
      %s171 = sphi 0, %s155
      %s177 = sphi 0, %s179
      %s180 = sphi 0, %s177
      %s181 = sphi 0, %s180
      %s197 = sphi 0, %s181
    $region4: #{tpu_custom_call.1} parent=1 // loop_header_branch
      %24 = sbr.rel (%p22) target = $region8
    $region5: #{tpu_custom_call.1} parent=1 // loop_body
      %s26 = ssub.s32 %s21, 1
      %s27 = ssub.s32 %s21, 2
      %s34 = sadd.s32 1, %s29
      %p35 = scmp.ge.s32.totalorder %s34, 1
      %s36 = scalar_select %p35, 0, %s34
      %s37 = sadd.s32 1, %s28
      %s38 = scalar_select %p35, %s37, %s28
      %p39 = scmp.ge.s32.totalorder %s38, 3
      %s40 = scalar_select %p39, 0, %s38
      %s41 = ssub.s32 %s28, %s40
      %p42 = scmp.eq.s32.totalorder %s41, 0
      %s44 = sadd.s32 %s43, 1
      %s45 = scalar_select %p42, %s43, %s44
      %p48 = pneg %p42
      %p49 = scmp.eq.s32.totalorder %s21, 2
      %p50 = por %p48, %p49
      %p51 = scmp.ne.s32.totalorder %s43, %s46
      %p52 = scmp.eq.s32.totalorder %s21, 0
      %p53 = por %p51, %p52
      %p54 = scmp.ne.s32.totalorder %s43, %s46
      %p55 = scmp.eq.s32.totalorder %s26, 2
      %p56 = por %p54, %p55
      %p57 = scmp.ne.s32.totalorder %s46, %s47
      %p58 = scmp.eq.s32.totalorder %s26, 0
      %p59 = por %p57, %p58
      %p60 = scmp.ne.s32.totalorder %s46, %s47
      %p61 = scmp.eq.s32.totalorder %s27, 2
      %p62 = por %p60, %p61
      %p64 = scmp.ne.s32.totalorder %s47, %s63
      %p65 = scmp.eq.s32.totalorder %s27, 0
      %p66 = por %p64, %p65
      %s67 = ssub.s32 %s28, %s40
      %p68 = scmp.eq.s32.totalorder %s67, 0
      %s70 = sadd.s32 %s69, 1
      %s71 = scalar_select %p68, %s69, %s70
      %p74 = pneg %p68
      %p75 = scmp.eq.s32.totalorder %s21, 2
      %p76 = por %p74, %p75
      %p77 = scmp.ne.s32.totalorder %s69, %s72
      %p78 = scmp.eq.s32.totalorder %s21, 0
      %p79 = por %p77, %p78
      %p80 = scmp.ne.s32.totalorder %s69, %s72
      %p81 = scmp.eq.s32.totalorder %s26, 2
      %p82 = por %p80, %p81
      %p83 = scmp.ne.s32.totalorder %s72, %s73
      %p84 = scmp.eq.s32.totalorder %s26, 0
      %p85 = por %p83, %p84
      %p86 = scmp.ne.s32.totalorder %s72, %s73
      %p87 = scmp.eq.s32.totalorder %s27, 2
      %p88 = por %p86, %p87
      %p90 = scmp.ne.s32.totalorder %s73, %s89
      %p91 = scmp.eq.s32.totalorder %s27, 0
      %p92 = por %p90, %p91
      %s93 = ssub.s32 %s29, %s36
      %p94 = scmp.eq.s32.totalorder %s93, 0
      %s96 = sadd.s32 %s95, 1
      %s97 = scalar_select %p94, %s95, %s96
      %p100 = pneg %p94
      %p101 = scmp.eq.s32.totalorder %s21, 2
      %p102 = por %p100, %p101
      %p103 = scmp.ne.s32.totalorder %s95, %s98
      %p104 = scmp.eq.s32.totalorder %s21, 0
      %p105 = por %p103, %p104
      %p106 = scmp.ne.s32.totalorder %s95, %s98
      %p107 = scmp.eq.s32.totalorder %s26, 2
      %p108 = por %p106, %p107
      %p109 = scmp.ne.s32.totalorder %s98, %s99
      %p110 = scmp.eq.s32.totalorder %s26, 0
      %p111 = por %p109, %p110
      %p112 = scmp.ne.s32.totalorder %s98, %s99
      %p113 = scmp.eq.s32.totalorder %s27, 2
      %p114 = por %p112, %p113
      %p116 = scmp.ne.s32.totalorder %s99, %s115
      %p117 = scmp.eq.s32.totalorder %s27, 0
      %p118 = por %p116, %p117
      %s119 = ssub.s32 %s29, %s36
      %p120 = scmp.eq.s32.totalorder %s119, 0
      %s122 = sadd.s32 %s121, 1
      %s123 = scalar_select %p120, %s121, %s122
      %p126 = pneg %p120
      %p127 = scmp.eq.s32.totalorder %s21, 2
      %p128 = por %p126, %p127
      %p129 = scmp.ne.s32.totalorder %s121, %s124
      %p130 = scmp.eq.s32.totalorder %s21, 0
      %p131 = por %p129, %p130
      %p132 = scmp.ne.s32.totalorder %s121, %s124
      %p133 = scmp.eq.s32.totalorder %s26, 2
      %p134 = por %p132, %p133
      %p135 = scmp.ne.s32.totalorder %s124, %s125
      %p136 = scmp.eq.s32.totalorder %s26, 0
      %p137 = por %p135, %p136
      %p138 = scmp.ne.s32.totalorder %s124, %s125
      %p139 = scmp.eq.s32.totalorder %s27, 2
      %p140 = por %p138, %p139
      %p142 = scmp.ne.s32.totalorder %s125, %s141
      %p143 = scmp.eq.s32.totalorder %s27, 0
      %p144 = por %p142, %p143
      %s145 = sld [smem:[#allocation4 + %s28]]
      %s146 = sld [smem:[#allocation4 + %s40]]
      %s147 = ssub.s32 %s145, %s146
      %s148 = ssub.s32 %s29, %s36
      %s149 = sor.u32 %s147, %s148
      %p150 = scmp.eq.s32.totalorder %s149, 0
      %s152 = sadd.s32 %s151, 1
      %s153 = scalar_select %p150, %s151, %s152
      %p156 = pneg %p150
      %p157 = scmp.eq.s32.totalorder %s21, 2
      %p158 = por %p156, %p157
      %p159 = scmp.ne.s32.totalorder %s151, %s154
      %p160 = scmp.eq.s32.totalorder %s21, 0
      %p161 = por %p159, %p160
      %p162 = scmp.ne.s32.totalorder %s151, %s154
      %p163 = scmp.eq.s32.totalorder %s26, 2
      %p164 = por %p162, %p163
      %p165 = scmp.ne.s32.totalorder %s154, %s155
      %p166 = scmp.eq.s32.totalorder %s26, 0
      %p167 = por %p165, %p166
      %p168 = scmp.ne.s32.totalorder %s154, %s155
      %p169 = scmp.eq.s32.totalorder %s27, 2
      %p170 = por %p168, %p169
      %p172 = scmp.ne.s32.totalorder %s155, %s171
      %p173 = scmp.eq.s32.totalorder %s27, 0
      %p174 = por %p172, %p173
      %s175 = ssub.s32 %s28, %s40
      %p176 = scmp.eq.s32.totalorder %s175, 0
      %s178 = sadd.s32 %s177, 1
      %s179 = scalar_select %p176, %s177, %s178
      %p182 = pneg %p176
      %p183 = scmp.eq.s32.totalorder %s21, 2
      %p184 = por %p182, %p183
      %p185 = scmp.ne.s32.totalorder %s177, %s180
      %p186 = scmp.eq.s32.totalorder %s21, 0
      %p187 = por %p185, %p186
      %p188 = scmp.ne.s32.totalorder %s177, %s180
      %p189 = scmp.eq.s32.totalorder %s26, 2
      %p190 = por %p188, %p189
      %p191 = scmp.ne.s32.totalorder %s180, %s181
      %p192 = scmp.eq.s32.totalorder %s26, 0
      %p193 = por %p191, %p192
      %p194 = scmp.ne.s32.totalorder %s180, %s181
      %p195 = scmp.eq.s32.totalorder %s27, 2
      %p196 = por %p194, %p195
      %p198 = scmp.ne.s32.totalorder %s181, %s197
      %p199 = scmp.eq.s32.totalorder %s27, 0
      %p200 = por %p198, %p199
      %p201 = scmp.le.s32.totalorder 1, %s21
      %p202 = scmp.lt.s32.totalorder %s21, 4
      %p203 = pnand %p201, %p202
      %p204 = pneg %p203
      // Predicated region
      $region9: #{tpu_custom_call.1} parent=5 // pred_check
        _
      $region10: #{tpu_custom_call.1} parent=5 // pred_check_branch
        %206 = sbr.rel (%p203) target = $region12
      $region11: #{tpu_custom_call.1} parent=5 // pred_region
        %s207 = ssub.s32 %s21, 1
        // Predicated region
        $region13: #{tpu_custom_call.1} parent=11 // pred_check
          %p208 = pneg %p111
        $region14: #{tpu_custom_call.1} parent=11 // pred_check_branch
          %210 = sbr.rel (%p208) target = $region16
        $region15: #{tpu_custom_call.1} parent=11 // pred_region
          %s211 = smul.u32 2, %s31
          %p212 = scmp.lt.s32.totalorder %s211, 1
          %s213 = scalar_select %p212, %s211, 1
          %s214 = smul.addr %s213, 4
          %s215 = scalar_lea.vmem %s3, %s214
          %s216 = smul.u32 2, %s31
        $region16: #{tpu_custom_call.1} parent=11 // pred_fallthru
          _
        // Predicated region
        $region17: #{tpu_custom_call.1} parent=11 // pred_check
          %p217 = pneg %p137
        $region18: #{tpu_custom_call.1} parent=11 // pred_check_branch
          %219 = sbr.rel (%p217) target = $region20
        $region19: #{tpu_custom_call.1} parent=11 // pred_region
          %s220 = smul.u32 2, %s31
          %p221 = scmp.lt.s32.totalorder %s220, 1
          %s222 = scalar_select %p221, %s220, 1
          %s223 = smul.addr %s222, 4
          %s224 = scalar_lea.vmem %s4, %s223
          %s225 = smul.u32 2, %s31
        $region20: #{tpu_custom_call.1} parent=11 // pred_fallthru
          _
      $region12: #{tpu_custom_call.1} parent=5 // pred_fallthru
        _
      %p226 = scmp.lt.s32.totalorder %s21, 3
      // Predicated region
      $region21: #{tpu_custom_call.1} parent=5 // pred_check
        %p227 = pneg %p226
      $region22: #{tpu_custom_call.1} parent=5 // pred_check_branch
        %229 = sbr.rel (%p227) target = $region24
      $region23: #{tpu_custom_call.1} parent=5 // pred_region
        // Predicated region
        $region25: #{tpu_custom_call.1} parent=23 // pred_check
          %p230 = pneg %p53
        $region26: #{tpu_custom_call.1} parent=23 // pred_check_branch
          %232 = sbr.rel (%p230) target = $region28
        $region27: #{tpu_custom_call.1} parent=23 // pred_region
          %s233 = smul.u32 32, %s28
          %p234 = scmp.lt.s32.totalorder %s233, 95
          %s235 = scalar_select %p234, %s233, 95
          %s236 = smul.addr %s235, 4
          %s237 = scalar_lea.vmem %s1, %s236
          %s238 = smul.u32 32, %s28
        $region28: #{tpu_custom_call.1} parent=23 // pred_fallthru
          _
        // Predicated region
        $region29: #{tpu_custom_call.1} parent=23 // pred_check
          %p239 = pneg %p79
        $region30: #{tpu_custom_call.1} parent=23 // pred_check_branch
          %241 = sbr.rel (%p239) target = $region32
        $region31: #{tpu_custom_call.1} parent=23 // pred_region
          %s242 = smul.u32 32, %s28
          %p243 = scmp.lt.s32.totalorder %s242, 95
          %s244 = scalar_select %p243, %s242, 95
          %s245 = smul.addr %s244, 4
          %s246 = scalar_lea.vmem %s2, %s245
          %s247 = smul.u32 32, %s28
        $region32: #{tpu_custom_call.1} parent=23 // pred_fallthru
          _
        // Predicated region
        $region33: #{tpu_custom_call.1} parent=23 // pred_check
          %p248 = pneg %p161
        $region34: #{tpu_custom_call.1} parent=23 // pred_check_branch
          %250 = sbr.rel (%p248) target = $region36
        $region35: #{tpu_custom_call.1} parent=23 // pred_region
          %s251 = sld [smem:[#allocation4 + %s28]]
          %s252 = smul.u32 32, %s29
          %p253 = scmp.lt.s32.totalorder %s251, 1
          %s254 = scalar_select %p253, %s251, 1
          %p255 = scmp.lt.s32.totalorder %s252, 31
          %s256 = scalar_select %p255, %s252, 31
          %s257 = smul.addr %s254, 32
          %s258 = sadd.s32 %s256, %s257
          %s259 = smul.addr %s258, 4
          %s260 = scalar_lea.vmem %s5, %s259
          %s261 = sld [smem:[#allocation4 + %s28]]
          %s262 = smul.u32 32, %s29
        $region36: #{tpu_custom_call.1} parent=23 // pred_fallthru
          _
      $region24: #{tpu_custom_call.1} parent=5 // pred_fallthru
        _
      %p263 = scmp.le.s32.totalorder 1, %s21
      %p264 = scmp.lt.s32.totalorder %s21, 4
      %p265 = pnand %p263, %p264
      %p266 = pneg %p265
      // Predicated region
      $region37: #{tpu_custom_call.1} parent=5 // pred_check
        _
      $region38: #{tpu_custom_call.1} parent=5 // pred_check_branch
        %268 = sbr.rel (%p265) target = $region40
      $region39: #{tpu_custom_call.1} parent=5 // pred_region
        %s269 = ssub.s32 %s21, 1
        %s270 = smul.u32 32, %s30
        %p271 = scmp.lt.s32.totalorder %s270, 95
        %s272 = scalar_select %p271, %s270, 95
        %s273 = smul.addr %s272, 4
        %s274 = scalar_lea.vmem %s1, %s273
        %p275 = pneg %p59
        %p276 = pneg %p56
        %s277 = smul.u32 32, %s30
        %p278 = scmp.lt.s32.totalorder %s277, 95
        %s279 = scalar_select %p278, %s277, 95
        %s280 = smul.addr %s279, 4
        %s281 = scalar_lea.vmem %s2, %s280
        %p282 = pneg %p85
        %p283 = pneg %p82
        %s284 = smul.u32 2, %s31
        %p285 = scmp.lt.s32.totalorder %s284, 1
        %s286 = scalar_select %p285, %s284, 1
        %s287 = smul.addr %s286, 4
        %s288 = scalar_lea.vmem %s3, %s287
        %p289 = pneg %p111
        %p290 = pneg %p108
        %s291 = smul.u32 2, %s31
        %p292 = scmp.lt.s32.totalorder %s291, 1
        %s293 = scalar_select %p292, %s291, 1
        %s294 = smul.addr %s293, 4
        %s295 = scalar_lea.vmem %s4, %s294
        %p296 = pneg %p137
        %p297 = pneg %p134
        %s298 = sld [smem:[#allocation4 + %s30]]
        %s299 = smul.u32 32, %s31
        %p300 = scmp.lt.s32.totalorder %s298, 1
        %s301 = scalar_select %p300, %s298, 1
        %p302 = scmp.lt.s32.totalorder %s299, 31
        %s303 = scalar_select %p302, %s299, 31
        %s304 = smul.addr %s301, 32
        %s305 = sadd.s32 %s303, %s304
        %s306 = smul.addr %s305, 4
        %s307 = scalar_lea.vmem %s5, %s306
        %p308 = pneg %p167
        %p309 = pneg %p164
        %p310 = pneg %p193
        %p311 = pneg %p190
        %s312 = sand.u32 %s180, 1
        %s313 = scalar_lea.sflag [#allocation6], %s312
        %s314 = sand.u32 %s180, 1
        %s315 = smul.addr %s314, 128
        %s316 = scalar_lea.vmem [#allocation5], %s315
        %s317 = smul.u32 32, %s30
        %p318 = scmp.lt.s32.totalorder %s317, 95
        %s319 = scalar_select %p318, %s317, 95
        %s320 = smul.addr %s319, 4
        %s321 = scalar_lea.vmem %s1, %s320
        %s322 = smul.u32 32, %s30
        %s323 = smul.u32 32, %s30
        %p324 = scmp.lt.s32.totalorder %s323, 95
        %s325 = scalar_select %p324, %s323, 95
        %s326 = smul.addr %s325, 4
        %s327 = scalar_lea.vmem %s2, %s326
        %s328 = smul.u32 32, %s30
        %s329 = smul.u32 2, %s31
        %p330 = scmp.lt.s32.totalorder %s329, 1
        %s331 = scalar_select %p330, %s329, 1
        %s332 = smul.addr %s331, 4
        %s333 = scalar_lea.vmem %s3, %s332
        %s334 = smul.u32 2, %s31
        %s335 = smul.u32 2, %s31
        %p336 = scmp.lt.s32.totalorder %s335, 1
        %s337 = scalar_select %p336, %s335, 1
        %s338 = smul.addr %s337, 4
        %s339 = scalar_lea.vmem %s4, %s338
        %s340 = smul.u32 2, %s31
        %s341 = sld [smem:[#allocation4 + %s30]]
        %s342 = smul.u32 32, %s31
        %p343 = scmp.lt.s32.totalorder %s341, 1
        %s344 = scalar_select %p343, %s341, 1
        %p345 = scmp.lt.s32.totalorder %s342, 31
        %s346 = scalar_select %p345, %s342, 31
        %s347 = smul.addr %s344, 32
        %s348 = sadd.s32 %s346, %s347
        %s349 = smul.addr %s348, 4
        %s350 = scalar_lea.vmem %s5, %s349
        %s351 = sld [smem:[#allocation4 + %s30]]
        %s352 = smul.u32 32, %s31
        %s353 = smul.u32 32, %s30
        %p355 = scmp.eq.s32.totalorder %s31, 0
        // Predicated region
        $region41: #{tpu_custom_call.1} parent=39 // pred_check
          %p356 = pneg %p355
        $region42: #{tpu_custom_call.1} parent=39 // pred_check_branch
          %358 = sbr.rel (%p356) target = $region44
        $region43: #{tpu_custom_call.1} parent=39 // pred_region
          %359 = vst [vmem:[#allocation2] sm:$0xff] 0.0
          %360 = vst [vmem:[#allocation2 + $0x8] sm:$0xff] 0.0
          %361 = vst [vmem:[#allocation2 + $0x10] sm:$0xff] 0.0
          %362 = vst [vmem:[#allocation2 + $0x18] sm:$0xff] 0.0
          %363 = vst [vmem:[#allocation2 + $0x20] sm:$0xff] 0.0
          %364 = vst [vmem:[#allocation2 + $0x28] sm:$0xff] 0.0
          %365 = vst [vmem:[#allocation2 + $0x30] sm:$0xff] 0.0
          %366 = vst [vmem:[#allocation2 + $0x38] sm:$0xff] 0.0
          %367 = vst [vmem:[#allocation2 + $0x40] sm:$0xff] 0.0
          %368 = vst [vmem:[#allocation2 + $0x48] sm:$0xff] 0.0
          %369 = vst [vmem:[#allocation2 + $0x50] sm:$0xff] 0.0
          %370 = vst [vmem:[#allocation2 + $0x58] sm:$0xff] 0.0
          %371 = vst [vmem:[#allocation2 + $0x60] sm:$0xff] 0.0
          %372 = vst [vmem:[#allocation2 + $0x68] sm:$0xff] 0.0
          %373 = vst [vmem:[#allocation2 + $0x70] sm:$0xff] 0.0
          %374 = vst [vmem:[#allocation2 + $0x78] sm:$0xff] 0.0
          %375 = vst [vmem:[#allocation2 + $0x80] sm:$0xff] 0.0
          %376 = vst [vmem:[#allocation2 + $0x88] sm:$0xff] 0.0
          %377 = vst [vmem:[#allocation2 + $0x90] sm:$0xff] 0.0
          %378 = vst [vmem:[#allocation2 + $0x98] sm:$0xff] 0.0
          %379 = vst [vmem:[#allocation2 + $0xa0] sm:$0xff] 0.0
          %380 = vst [vmem:[#allocation2 + $0xa8] sm:$0xff] 0.0
          %381 = vst [vmem:[#allocation2 + $0xb0] sm:$0xff] 0.0
          %382 = vst [vmem:[#allocation2 + $0xb8] sm:$0xff] 0.0
          %383 = vst [vmem:[#allocation2 + $0xc0] sm:$0xff] 0.0
          %384 = vst [vmem:[#allocation2 + $0xc8] sm:$0xff] 0.0
          %385 = vst [vmem:[#allocation2 + $0xd0] sm:$0xff] 0.0
          %386 = vst [vmem:[#allocation2 + $0xd8] sm:$0xff] 0.0
          %387 = vst [vmem:[#allocation2 + $0xe0] sm:$0xff] 0.0
          %388 = vst [vmem:[#allocation2 + $0xe8] sm:$0xff] 0.0
          %389 = vst [vmem:[#allocation2 + $0xf0] sm:$0xff] 0.0
          %390 = vst [vmem:[#allocation2 + $0xf8] sm:$0xff] 0.0
        $region44: #{tpu_custom_call.1} parent=39 // pred_fallthru
          _
        %v391 = vld [vmem:[%s321] sm:$0xf]
        %v392 = vld [vmem:[%s321 + $0x4] sm:$0xf]
        %v393 = vld [vmem:[%s321 + $0x8] sm:$0xf]
        %v394 = vld [vmem:[%s321 + $0xc] sm:$0xf]
        %v395 = vld [vmem:[%s321 + $0x10] sm:$0xf]
        %v396 = vld [vmem:[%s321 + $0x14] sm:$0xf]
        %v397 = vld [vmem:[%s321 + $0x18] sm:$0xf]
        %v398 = vld [vmem:[%s321 + $0x1c] sm:$0xf]
        %v399 = vld [vmem:[%s321 + $0x20] sm:$0xf]
        %v400 = vld [vmem:[%s321 + $0x24] sm:$0xf]
        %v401 = vld [vmem:[%s321 + $0x28] sm:$0xf]
        %v402 = vld [vmem:[%s321 + $0x2c] sm:$0xf]
        %v403 = vld [vmem:[%s321 + $0x30] sm:$0xf]
        %v404 = vld [vmem:[%s321 + $0x34] sm:$0xf]
        %v405 = vld [vmem:[%s321 + $0x38] sm:$0xf]
        %v406 = vld [vmem:[%s321 + $0x3c] sm:$0xf]
        %v407 = vld [vmem:[%s321 + $0x40] sm:$0xf]
        %v408 = vld [vmem:[%s321 + $0x44] sm:$0xf]
        %v409 = vld [vmem:[%s321 + $0x48] sm:$0xf]
        %v410 = vld [vmem:[%s321 + $0x4c] sm:$0xf]
        %v411 = vld [vmem:[%s321 + $0x50] sm:$0xf]
        %v412 = vld [vmem:[%s321 + $0x54] sm:$0xf]
        %v413 = vld [vmem:[%s321 + $0x58] sm:$0xf]
        %v414 = vld [vmem:[%s321 + $0x5c] sm:$0xf]
        %v415 = vld [vmem:[%s321 + $0x60] sm:$0xf]
        %v416 = vld [vmem:[%s321 + $0x64] sm:$0xf]
        %v417 = vld [vmem:[%s321 + $0x68] sm:$0xf]
        %v418 = vld [vmem:[%s321 + $0x6c] sm:$0xf]
        %v419 = vld [vmem:[%s321 + $0x70] sm:$0xf]
        %v420 = vld [vmem:[%s321 + $0x74] sm:$0xf]
        %v421 = vld [vmem:[%s321 + $0x78] sm:$0xf]
        %v422 = vld [vmem:[%s321 + $0x7c] sm:$0xf]
        %v423 = vld [vmem:[%s333] sm:$0xff]
        %v424 = vld [vmem:[%s333 + $0x8] sm:$0xff]
        %v457 = vunpack.c.l.b16 %v391
        %v458 = vunpack.c.l.b16 %v392
        %v459 = vunpack.c.l.b16 %v393
        %v460 = vunpack.c.l.b16 %v394
        %v461 = vunpack.c.l.b16 %v395
        %v462 = vunpack.c.l.b16 %v396
        %v463 = vunpack.c.l.b16 %v397
        %v464 = vunpack.c.l.b16 %v398
        %v465 = vunpack.c.l.b16 %v399
        %v466 = vunpack.c.l.b16 %v400
        %v467 = vunpack.c.l.b16 %v401
        %v468 = vunpack.c.l.b16 %v402
        %v469 = vunpack.c.l.b16 %v403
        %v470 = vunpack.c.l.b16 %v404
        %v471 = vunpack.c.l.b16 %v405
        %v472 = vunpack.c.l.b16 %v406
        %v473 = vunpack.c.l.b16 %v407
        %v474 = vunpack.c.l.b16 %v408
        %v475 = vunpack.c.l.b16 %v409
        %v476 = vunpack.c.l.b16 %v410
        %v477 = vunpack.c.l.b16 %v411
        %v478 = vunpack.c.l.b16 %v412
        %v479 = vunpack.c.l.b16 %v413
        %v480 = vunpack.c.l.b16 %v414
        %v481 = vunpack.c.l.b16 %v415
        %v482 = vunpack.c.l.b16 %v416
        %v483 = vunpack.c.l.b16 %v417
        %v484 = vunpack.c.l.b16 %v418
        %v485 = vunpack.c.l.b16 %v419
        %v486 = vunpack.c.l.b16 %v420
        %v487 = vunpack.c.l.b16 %v421
        %v488 = vunpack.c.l.b16 %v422
        %v489 = vpack.c.b16 %v458, %v457
        %v490 = vpack.c.b16 %v460, %v459
        %v491 = vpack.c.b16 %v462, %v461
        %v492 = vpack.c.b16 %v464, %v463
        %v493 = vpack.c.b16 %v466, %v465
        %v494 = vpack.c.b16 %v468, %v467
        %v495 = vpack.c.b16 %v470, %v469
        %v496 = vpack.c.b16 %v472, %v471
        %v497 = vpack.c.b16 %v474, %v473
        %v498 = vpack.c.b16 %v476, %v475
        %v499 = vpack.c.b16 %v478, %v477
        %v500 = vpack.c.b16 %v480, %v479
        %v501 = vpack.c.b16 %v482, %v481
        %v502 = vpack.c.b16 %v484, %v483
        %v503 = vpack.c.b16 %v486, %v485
        %v504 = vpack.c.b16 %v488, %v487
        %v507 = vunpack.c.l.b16 %v423
        %v508 = vunpack.c.h.b16 %v423
        %v509 = vunpack.c.l.b16 %v424
        %v510 = vunpack.c.h.b16 %v424
        %v511 = vpack.c.b16 %v509, %v507
        %v512 = vpack.c.b16 %v510, %v508
        %vm515 = vcmask 130048
        %v517 = vsel %vm515, %v489, 0
        %v520 = vsel %vm515, %v490, 0
        %v523 = vsel %vm515, %v491, 0
        %v526 = vsel %vm515, %v492, 0
        %v529 = vsel %vm515, %v493, 0
        %v532 = vsel %vm515, %v494, 0
        %v535 = vsel %vm515, %v495, 0
        %v538 = vsel %vm515, %v496, 0
        %v541 = vsel %vm515, %v497, 0
        %v544 = vsel %vm515, %v498, 0
        %v547 = vsel %vm515, %v499, 0
        %v550 = vsel %vm515, %v500, 0
        %v553 = vsel %vm515, %v501, 0
        %v556 = vsel %vm515, %v502, 0
        %v559 = vsel %vm515, %v503, 0
        %v562 = vsel %vm515, %v504, 0
        %564 = vmatprep.subr.bf16.mxu0 0
        %565 = vmatpush1.bf16.msra.mxu0 0
        %566 = vmatprep.subr.bf16.mxu0 0
        %567 = vmatpush1.bf16.msra.mxu0 0
        %568 = vmatprep.subr.bf16.mxu0 0
        %569 = vmatpush1.bf16.msra.mxu0 0
        %570 = vmatprep.subr.bf16.mxu0 0
        %571 = vmatpush1.bf16.msra.mxu0 0
        %572 = vmatprep.subr.bf16.mxu0 0
        %573 = vmatpush1.bf16.msra.mxu0 0
        %574 = vmatprep.subr.bf16.mxu0 0
        %575 = vmatpush1.bf16.msra.mxu0 0
        %576 = vmatprep.subr.bf16.mxu0 0
        %577 = vmatpush1.bf16.msra.mxu0 0
        %578 = vmatprep.subr.bf16.mxu0 %v512
        %579 = vmatpush1.bf16.msra.mxu0 %v511
        %580 = vmatprep.subr.bf16.mxu0 0
        %581 = vmatpush2.bf16.msra.mxu0 0
        %582 = vmatprep.subr.bf16.mxu0 0
        %583 = vmatpush2.bf16.msra.mxu0 0
        %584 = vmatprep.subr.bf16.mxu0 0
        %585 = vmatpush2.bf16.msra.mxu0 0
        %586 = vmatprep.subr.bf16.mxu0 0
        %587 = vmatpush2.bf16.msra.mxu0 0
        %588 = vmatprep.subr.bf16.mxu0 0
        %589 = vmatpush2.bf16.msra.mxu0 0
        %590 = vmatprep.subr.bf16.mxu0 0
        %591 = vmatpush2.bf16.msra.mxu0 0
        %592 = vmatprep.subr.bf16.mxu0 0
        %593 = vmatpush2.bf16.msra.mxu0 0
        %594 = vmatprep.subr.bf16.mxu0 0
        %595 = vmatpush2.bf16.msra.mxu0 0
        %596 = vmatprep.mubr.bf16.mxu0 0
        %597 = vmatmul.mubr.bf16.gmra.mxu0 %v517
        %v598 = vpop.f32.mrf.mxu0
        %v599 = vadd.f32 0.0, %v598
        %v600 = vpop.f32.mrf.mxu0
        %v601 = vadd.f32 0.0, %v600
        %v602 = vpop.f32.mrf.mxu0
        %v603 = vadd.f32 0.0, %v602
        %v604 = vpop.f32.mrf.mxu0
        %v605 = vadd.f32 0.0, %v604
        %606 = vmatprep.mubr.bf16.mxu0 0
        %607 = vmatmul.mubr.bf16.gmra.mxu0 %v520
        %v608 = vpop.f32.mrf.mxu0
        %v609 = vadd.f32 0.0, %v608
        %v610 = vpop.f32.mrf.mxu0
        %v611 = vadd.f32 0.0, %v610
        %v612 = vpop.f32.mrf.mxu0
        %v613 = vadd.f32 0.0, %v612
        %v614 = vpop.f32.mrf.mxu0
        %v615 = vadd.f32 0.0, %v614
        %616 = vmatprep.mubr.bf16.mxu0 0
        %617 = vmatmul.mubr.bf16.gmra.mxu0 %v523
        %v618 = vpop.f32.mrf.mxu0
        %v619 = vadd.f32 0.0, %v618
        %v620 = vpop.f32.mrf.mxu0
        %v621 = vadd.f32 0.0, %v620
        %v622 = vpop.f32.mrf.mxu0
        %v623 = vadd.f32 0.0, %v622
        %v624 = vpop.f32.mrf.mxu0
        %v625 = vadd.f32 0.0, %v624
        %626 = vmatprep.mubr.bf16.mxu0 0
        %627 = vmatmul.mubr.bf16.gmra.mxu0 %v526
        %v628 = vpop.f32.mrf.mxu0
        %v629 = vadd.f32 0.0, %v628
        %v630 = vpop.f32.mrf.mxu0
        %v631 = vadd.f32 0.0, %v630
        %v632 = vpop.f32.mrf.mxu0
        %v633 = vadd.f32 0.0, %v632
        %v634 = vpop.f32.mrf.mxu0
        %v635 = vadd.f32 0.0, %v634
        %636 = vmatprep.mubr.bf16.mxu0 0
        %637 = vmatmul.mubr.bf16.gmra.mxu0 %v529
        %v638 = vpop.f32.mrf.mxu0
        %v639 = vadd.f32 0.0, %v638
        %v640 = vpop.f32.mrf.mxu0
        %v641 = vadd.f32 0.0, %v640
        %v642 = vpop.f32.mrf.mxu0
        %v643 = vadd.f32 0.0, %v642
        %v644 = vpop.f32.mrf.mxu0
        %v645 = vadd.f32 0.0, %v644
        %646 = vmatprep.mubr.bf16.mxu0 0
        %647 = vmatmul.mubr.bf16.gmra.mxu0 %v532
        %v648 = vpop.f32.mrf.mxu0
        %v649 = vadd.f32 0.0, %v648
        %v650 = vpop.f32.mrf.mxu0
        %v651 = vadd.f32 0.0, %v650
        %v652 = vpop.f32.mrf.mxu0
        %v653 = vadd.f32 0.0, %v652
        %v654 = vpop.f32.mrf.mxu0
        %v655 = vadd.f32 0.0, %v654
        %656 = vmatprep.mubr.bf16.mxu0 0
        %657 = vmatmul.mubr.bf16.gmra.mxu0 %v535
        %v658 = vpop.f32.mrf.mxu0
        %v659 = vadd.f32 0.0, %v658
        %v660 = vpop.f32.mrf.mxu0
        %v661 = vadd.f32 0.0, %v660
        %v662 = vpop.f32.mrf.mxu0
        %v663 = vadd.f32 0.0, %v662
        %v664 = vpop.f32.mrf.mxu0
        %v665 = vadd.f32 0.0, %v664
        %666 = vmatprep.mubr.bf16.mxu0 0
        %667 = vmatmul.mubr.bf16.gmra.mxu0 %v538
        %v668 = vpop.f32.mrf.mxu0
        %v669 = vadd.f32 0.0, %v668
        %v670 = vpop.f32.mrf.mxu0
        %v671 = vadd.f32 0.0, %v670
        %v672 = vpop.f32.mrf.mxu0
        %v673 = vadd.f32 0.0, %v672
        %v674 = vpop.f32.mrf.mxu0
        %v675 = vadd.f32 0.0, %v674
        %676 = vmatprep.mubr.bf16.mxu0 0
        %677 = vmatmul.mubr.bf16.gmra.mxu0 %v541
        %v678 = vpop.f32.mrf.mxu0
        %v679 = vadd.f32 0.0, %v678
        %v680 = vpop.f32.mrf.mxu0
        %v681 = vadd.f32 0.0, %v680
        %v682 = vpop.f32.mrf.mxu0
        %v683 = vadd.f32 0.0, %v682
        %v684 = vpop.f32.mrf.mxu0
        %v685 = vadd.f32 0.0, %v684
        %686 = vmatprep.mubr.bf16.mxu0 0
        %687 = vmatmul.mubr.bf16.gmra.mxu0 %v544
        %v688 = vpop.f32.mrf.mxu0
        %v689 = vadd.f32 0.0, %v688
        %v690 = vpop.f32.mrf.mxu0
        %v691 = vadd.f32 0.0, %v690
        %v692 = vpop.f32.mrf.mxu0
        %v693 = vadd.f32 0.0, %v692
        %v694 = vpop.f32.mrf.mxu0
        %v695 = vadd.f32 0.0, %v694
        %696 = vmatprep.mubr.bf16.mxu0 0
        %697 = vmatmul.mubr.bf16.gmra.mxu0 %v547
        %v698 = vpop.f32.mrf.mxu0
        %v699 = vadd.f32 0.0, %v698
        %v700 = vpop.f32.mrf.mxu0
        %v701 = vadd.f32 0.0, %v700
        %v702 = vpop.f32.mrf.mxu0
        %v703 = vadd.f32 0.0, %v702
        %v704 = vpop.f32.mrf.mxu0
        %v705 = vadd.f32 0.0, %v704
        %706 = vmatprep.mubr.bf16.mxu0 0
        %707 = vmatmul.mubr.bf16.gmra.mxu0 %v550
        %v708 = vpop.f32.mrf.mxu0
        %v709 = vadd.f32 0.0, %v708
        %v710 = vpop.f32.mrf.mxu0
        %v711 = vadd.f32 0.0, %v710
        %v712 = vpop.f32.mrf.mxu0
        %v713 = vadd.f32 0.0, %v712
        %v714 = vpop.f32.mrf.mxu0
        %v715 = vadd.f32 0.0, %v714
        %716 = vmatprep.mubr.bf16.mxu0 0
        %717 = vmatmul.mubr.bf16.gmra.mxu0 %v553
        %v718 = vpop.f32.mrf.mxu0
        %v719 = vadd.f32 0.0, %v718
        %v720 = vpop.f32.mrf.mxu0
        %v721 = vadd.f32 0.0, %v720
        %v722 = vpop.f32.mrf.mxu0
        %v723 = vadd.f32 0.0, %v722
        %v724 = vpop.f32.mrf.mxu0
        %v725 = vadd.f32 0.0, %v724
        %726 = vmatprep.mubr.bf16.mxu0 0
        %727 = vmatmul.mubr.bf16.gmra.mxu0 %v556
        %v728 = vpop.f32.mrf.mxu0
        %v729 = vadd.f32 0.0, %v728
        %v730 = vpop.f32.mrf.mxu0
        %v731 = vadd.f32 0.0, %v730
        %v732 = vpop.f32.mrf.mxu0
        %v733 = vadd.f32 0.0, %v732
        %v734 = vpop.f32.mrf.mxu0
        %v735 = vadd.f32 0.0, %v734
        %736 = vmatprep.mubr.bf16.mxu0 0
        %737 = vmatmul.mubr.bf16.gmra.mxu0 %v559
        %v738 = vpop.f32.mrf.mxu0
        %v739 = vadd.f32 0.0, %v738
        %v740 = vpop.f32.mrf.mxu0
        %v741 = vadd.f32 0.0, %v740
        %v742 = vpop.f32.mrf.mxu0
        %v743 = vadd.f32 0.0, %v742
        %v744 = vpop.f32.mrf.mxu0
        %v745 = vadd.f32 0.0, %v744
        %746 = vmatprep.mubr.bf16.mxu0 0
        %747 = vmatmul.mubr.bf16.gmra.mxu0 %v562
        %v748 = vpop.f32.mrf.mxu0
        %v749 = vadd.f32 0.0, %v748
        %v750 = vpop.f32.mrf.mxu0
        %v751 = vadd.f32 0.0, %v750
        %v752 = vpop.f32.mrf.mxu0
        %v753 = vadd.f32 0.0, %v752
        %v754 = vpop.f32.mrf.mxu0
        %v755 = vadd.f32 0.0, %v754
        %756 = vdwg.mxu0
        %v757 = vld [vmem:[%s327] sm:$0xf]
        %v758 = vld [vmem:[%s327 + $0x4] sm:$0xf]
        %v759 = vld [vmem:[%s327 + $0x8] sm:$0xf]
        %v760 = vld [vmem:[%s327 + $0xc] sm:$0xf]
        %v761 = vld [vmem:[%s327 + $0x10] sm:$0xf]
        %v762 = vld [vmem:[%s327 + $0x14] sm:$0xf]
        %v763 = vld [vmem:[%s327 + $0x18] sm:$0xf]
        %v764 = vld [vmem:[%s327 + $0x1c] sm:$0xf]
        %v765 = vld [vmem:[%s327 + $0x20] sm:$0xf]
        %v766 = vld [vmem:[%s327 + $0x24] sm:$0xf]
        %v767 = vld [vmem:[%s327 + $0x28] sm:$0xf]
        %v768 = vld [vmem:[%s327 + $0x2c] sm:$0xf]
        %v769 = vld [vmem:[%s327 + $0x30] sm:$0xf]
        %v770 = vld [vmem:[%s327 + $0x34] sm:$0xf]
        %v771 = vld [vmem:[%s327 + $0x38] sm:$0xf]
        %v772 = vld [vmem:[%s327 + $0x3c] sm:$0xf]
        %v773 = vld [vmem:[%s327 + $0x40] sm:$0xf]
        %v774 = vld [vmem:[%s327 + $0x44] sm:$0xf]
        %v775 = vld [vmem:[%s327 + $0x48] sm:$0xf]
        %v776 = vld [vmem:[%s327 + $0x4c] sm:$0xf]
        %v777 = vld [vmem:[%s327 + $0x50] sm:$0xf]
        %v778 = vld [vmem:[%s327 + $0x54] sm:$0xf]
        %v779 = vld [vmem:[%s327 + $0x58] sm:$0xf]
        %v780 = vld [vmem:[%s327 + $0x5c] sm:$0xf]
        %v781 = vld [vmem:[%s327 + $0x60] sm:$0xf]
        %v782 = vld [vmem:[%s327 + $0x64] sm:$0xf]
        %v783 = vld [vmem:[%s327 + $0x68] sm:$0xf]
        %v784 = vld [vmem:[%s327 + $0x6c] sm:$0xf]
        %v785 = vld [vmem:[%s327 + $0x70] sm:$0xf]
        %v786 = vld [vmem:[%s327 + $0x74] sm:$0xf]
        %v787 = vld [vmem:[%s327 + $0x78] sm:$0xf]
        %v788 = vld [vmem:[%s327 + $0x7c] sm:$0xf]
        %v789 = vld [vmem:[%s339] sm:$0xff]
        %v790 = vld [vmem:[%s339 + $0x8] sm:$0xff]
        %v823 = vunpack.c.l.b16 %v757
        %v824 = vunpack.c.l.b16 %v758
        %v825 = vunpack.c.l.b16 %v759
        %v826 = vunpack.c.l.b16 %v760
        %v827 = vunpack.c.l.b16 %v761
        %v828 = vunpack.c.l.b16 %v762
        %v829 = vunpack.c.l.b16 %v763
        %v830 = vunpack.c.l.b16 %v764
        %v831 = vunpack.c.l.b16 %v765
        %v832 = vunpack.c.l.b16 %v766
        %v833 = vunpack.c.l.b16 %v767
        %v834 = vunpack.c.l.b16 %v768
        %v835 = vunpack.c.l.b16 %v769
        %v836 = vunpack.c.l.b16 %v770
        %v837 = vunpack.c.l.b16 %v771
        %v838 = vunpack.c.l.b16 %v772
        %v839 = vunpack.c.l.b16 %v773
        %v840 = vunpack.c.l.b16 %v774
        %v841 = vunpack.c.l.b16 %v775
        %v842 = vunpack.c.l.b16 %v776
        %v843 = vunpack.c.l.b16 %v777
        %v844 = vunpack.c.l.b16 %v778
        %v845 = vunpack.c.l.b16 %v779
        %v846 = vunpack.c.l.b16 %v780
        %v847 = vunpack.c.l.b16 %v781
        %v848 = vunpack.c.l.b16 %v782
        %v849 = vunpack.c.l.b16 %v783
        %v850 = vunpack.c.l.b16 %v784
        %v851 = vunpack.c.l.b16 %v785
        %v852 = vunpack.c.l.b16 %v786
        %v853 = vunpack.c.l.b16 %v787
        %v854 = vunpack.c.l.b16 %v788
        %v855 = vpack.c.b16 %v824, %v823
        %v856 = vpack.c.b16 %v826, %v825
        %v857 = vpack.c.b16 %v828, %v827
        %v858 = vpack.c.b16 %v830, %v829
        %v859 = vpack.c.b16 %v832, %v831
        %v860 = vpack.c.b16 %v834, %v833
        %v861 = vpack.c.b16 %v836, %v835
        %v862 = vpack.c.b16 %v838, %v837
        %v863 = vpack.c.b16 %v840, %v839
        %v864 = vpack.c.b16 %v842, %v841
        %v865 = vpack.c.b16 %v844, %v843
        %v866 = vpack.c.b16 %v846, %v845
        %v867 = vpack.c.b16 %v848, %v847
        %v868 = vpack.c.b16 %v850, %v849
        %v869 = vpack.c.b16 %v852, %v851
        %v870 = vpack.c.b16 %v854, %v853
        %v873 = vunpack.c.l.b16 %v789
        %v874 = vunpack.c.h.b16 %v789
        %v875 = vunpack.c.l.b16 %v790
        %v876 = vunpack.c.h.b16 %v790
        %v877 = vpack.c.b16 %v875, %v873
        %v878 = vpack.c.b16 %v876, %v874
        %v882 = vsel %vm515, %v855, 0
        %v885 = vsel %vm515, %v856, 0
        %v888 = vsel %vm515, %v857, 0
        %v891 = vsel %vm515, %v858, 0
        %v894 = vsel %vm515, %v859, 0
        %v897 = vsel %vm515, %v860, 0
        %v900 = vsel %vm515, %v861, 0
        %v903 = vsel %vm515, %v862, 0
        %v906 = vsel %vm515, %v863, 0
        %v909 = vsel %vm515, %v864, 0
        %v912 = vsel %vm515, %v865, 0
        %v915 = vsel %vm515, %v866, 0
        %v918 = vsel %vm515, %v867, 0
        %v921 = vsel %vm515, %v868, 0
        %v924 = vsel %vm515, %v869, 0
        %v927 = vsel %vm515, %v870, 0
        %929 = vmatprep.subr.bf16.mxu0 0
        %930 = vmatpush1.bf16.msra.mxu0 0
        %931 = vmatprep.subr.bf16.mxu0 0
        %932 = vmatpush1.bf16.msra.mxu0 0
        %933 = vmatprep.subr.bf16.mxu0 0
        %934 = vmatpush1.bf16.msra.mxu0 0
        %935 = vmatprep.subr.bf16.mxu0 0
        %936 = vmatpush1.bf16.msra.mxu0 0
        %937 = vmatprep.subr.bf16.mxu0 0
        %938 = vmatpush1.bf16.msra.mxu0 0
        %939 = vmatprep.subr.bf16.mxu0 0
        %940 = vmatpush1.bf16.msra.mxu0 0
        %941 = vmatprep.subr.bf16.mxu0 0
        %942 = vmatpush1.bf16.msra.mxu0 0
        %943 = vmatprep.subr.bf16.mxu0 %v878
        %944 = vmatpush1.bf16.msra.mxu0 %v877
        %945 = vmatprep.subr.bf16.mxu0 0
        %946 = vmatpush2.bf16.msra.mxu0 0
        %947 = vmatprep.subr.bf16.mxu0 0
        %948 = vmatpush2.bf16.msra.mxu0 0
        %949 = vmatprep.subr.bf16.mxu0 0
        %950 = vmatpush2.bf16.msra.mxu0 0
        %951 = vmatprep.subr.bf16.mxu0 0
        %952 = vmatpush2.bf16.msra.mxu0 0
        %953 = vmatprep.subr.bf16.mxu0 0
        %954 = vmatpush2.bf16.msra.mxu0 0
        %955 = vmatprep.subr.bf16.mxu0 0
        %956 = vmatpush2.bf16.msra.mxu0 0
        %957 = vmatprep.subr.bf16.mxu0 0
        %958 = vmatpush2.bf16.msra.mxu0 0
        %959 = vmatprep.subr.bf16.mxu0 0
        %960 = vmatpush2.bf16.msra.mxu0 0
        %961 = vmatprep.mubr.bf16.mxu0 0
        %962 = vmatmul.mubr.bf16.gmra.mxu0 %v882
        %v963 = vpop.f32.mrf.mxu0
        %v964 = vadd.f32 0.0, %v963
        %v965 = vpop.f32.mrf.mxu0
        %v966 = vadd.f32 0.0, %v965
        %v967 = vpop.f32.mrf.mxu0
        %v968 = vadd.f32 0.0, %v967
        %v969 = vpop.f32.mrf.mxu0
        %v970 = vadd.f32 0.0, %v969
        %971 = vmatprep.mubr.bf16.mxu0 0
        %972 = vmatmul.mubr.bf16.gmra.mxu0 %v885
        %v973 = vpop.f32.mrf.mxu0
        %v974 = vadd.f32 0.0, %v973
        %v975 = vpop.f32.mrf.mxu0
        %v976 = vadd.f32 0.0, %v975
        %v977 = vpop.f32.mrf.mxu0
        %v978 = vadd.f32 0.0, %v977
        %v979 = vpop.f32.mrf.mxu0
        %v980 = vadd.f32 0.0, %v979
        %981 = vmatprep.mubr.bf16.mxu0 0
        %982 = vmatmul.mubr.bf16.gmra.mxu0 %v888
        %v983 = vpop.f32.mrf.mxu0
        %v984 = vadd.f32 0.0, %v983
        %v985 = vpop.f32.mrf.mxu0
        %v986 = vadd.f32 0.0, %v985
        %v987 = vpop.f32.mrf.mxu0
        %v988 = vadd.f32 0.0, %v987
        %v989 = vpop.f32.mrf.mxu0
        %v990 = vadd.f32 0.0, %v989
        %991 = vmatprep.mubr.bf16.mxu0 0
        %992 = vmatmul.mubr.bf16.gmra.mxu0 %v891
        %v993 = vpop.f32.mrf.mxu0
        %v994 = vadd.f32 0.0, %v993
        %v995 = vpop.f32.mrf.mxu0
        %v996 = vadd.f32 0.0, %v995
        %v997 = vpop.f32.mrf.mxu0
        %v998 = vadd.f32 0.0, %v997
        %v999 = vpop.f32.mrf.mxu0
        %v1000 = vadd.f32 0.0, %v999
        %1001 = vmatprep.mubr.bf16.mxu0 0
        %1002 = vmatmul.mubr.bf16.gmra.mxu0 %v894
        %v1003 = vpop.f32.mrf.mxu0
        %v1004 = vadd.f32 0.0, %v1003
        %v1005 = vpop.f32.mrf.mxu0
        %v1006 = vadd.f32 0.0, %v1005
        %v1007 = vpop.f32.mrf.mxu0
        %v1008 = vadd.f32 0.0, %v1007
        %v1009 = vpop.f32.mrf.mxu0
        %v1010 = vadd.f32 0.0, %v1009
        %1011 = vmatprep.mubr.bf16.mxu0 0
        %1012 = vmatmul.mubr.bf16.gmra.mxu0 %v897
        %v1013 = vpop.f32.mrf.mxu0
        %v1014 = vadd.f32 0.0, %v1013
        %v1015 = vpop.f32.mrf.mxu0
        %v1016 = vadd.f32 0.0, %v1015
        %v1017 = vpop.f32.mrf.mxu0
        %v1018 = vadd.f32 0.0, %v1017
        %v1019 = vpop.f32.mrf.mxu0
        %v1020 = vadd.f32 0.0, %v1019
        %1021 = vmatprep.mubr.bf16.mxu0 0
        %1022 = vmatmul.mubr.bf16.gmra.mxu0 %v900
        %v1023 = vpop.f32.mrf.mxu0
        %v1024 = vadd.f32 0.0, %v1023
        %v1025 = vpop.f32.mrf.mxu0
        %v1026 = vadd.f32 0.0, %v1025
        %v1027 = vpop.f32.mrf.mxu0
        %v1028 = vadd.f32 0.0, %v1027
        %v1029 = vpop.f32.mrf.mxu0
        %v1030 = vadd.f32 0.0, %v1029
        %1031 = vmatprep.mubr.bf16.mxu0 0
        %1032 = vmatmul.mubr.bf16.gmra.mxu0 %v903
        %v1033 = vpop.f32.mrf.mxu0
        %v1034 = vadd.f32 0.0, %v1033
        %v1035 = vpop.f32.mrf.mxu0
        %v1036 = vadd.f32 0.0, %v1035
        %v1037 = vpop.f32.mrf.mxu0
        %v1038 = vadd.f32 0.0, %v1037
        %v1039 = vpop.f32.mrf.mxu0
        %v1040 = vadd.f32 0.0, %v1039
        %1041 = vmatprep.mubr.bf16.mxu0 0
        %1042 = vmatmul.mubr.bf16.gmra.mxu0 %v906
        %v1043 = vpop.f32.mrf.mxu0
        %v1044 = vadd.f32 0.0, %v1043
        %v1045 = vpop.f32.mrf.mxu0
        %v1046 = vadd.f32 0.0, %v1045
        %v1047 = vpop.f32.mrf.mxu0
        %v1048 = vadd.f32 0.0, %v1047
        %v1049 = vpop.f32.mrf.mxu0
        %v1050 = vadd.f32 0.0, %v1049
        %1051 = vmatprep.mubr.bf16.mxu0 0
        %1052 = vmatmul.mubr.bf16.gmra.mxu0 %v909
        %v1053 = vpop.f32.mrf.mxu0
        %v1054 = vadd.f32 0.0, %v1053
        %v1055 = vpop.f32.mrf.mxu0
        %v1056 = vadd.f32 0.0, %v1055
        %v1057 = vpop.f32.mrf.mxu0
        %v1058 = vadd.f32 0.0, %v1057
        %v1059 = vpop.f32.mrf.mxu0
        %v1060 = vadd.f32 0.0, %v1059
        %1061 = vmatprep.mubr.bf16.mxu0 0
        %1062 = vmatmul.mubr.bf16.gmra.mxu0 %v912
        %v1063 = vpop.f32.mrf.mxu0
        %v1064 = vadd.f32 0.0, %v1063
        %v1065 = vpop.f32.mrf.mxu0
        %v1066 = vadd.f32 0.0, %v1065
        %v1067 = vpop.f32.mrf.mxu0
        %v1068 = vadd.f32 0.0, %v1067
        %v1069 = vpop.f32.mrf.mxu0
        %v1070 = vadd.f32 0.0, %v1069
        %1071 = vmatprep.mubr.bf16.mxu0 0
        %1072 = vmatmul.mubr.bf16.gmra.mxu0 %v915
        %v1073 = vpop.f32.mrf.mxu0
        %v1074 = vadd.f32 0.0, %v1073
        %v1075 = vpop.f32.mrf.mxu0
        %v1076 = vadd.f32 0.0, %v1075
        %v1077 = vpop.f32.mrf.mxu0
        %v1078 = vadd.f32 0.0, %v1077
        %v1079 = vpop.f32.mrf.mxu0
        %v1080 = vadd.f32 0.0, %v1079
        %1081 = vmatprep.mubr.bf16.mxu0 0
        %1082 = vmatmul.mubr.bf16.gmra.mxu0 %v918
        %v1083 = vpop.f32.mrf.mxu0
        %v1084 = vadd.f32 0.0, %v1083
        %v1085 = vpop.f32.mrf.mxu0
        %v1086 = vadd.f32 0.0, %v1085
        %v1087 = vpop.f32.mrf.mxu0
        %v1088 = vadd.f32 0.0, %v1087
        %v1089 = vpop.f32.mrf.mxu0
        %v1090 = vadd.f32 0.0, %v1089
        %1091 = vmatprep.mubr.bf16.mxu0 0
        %1092 = vmatmul.mubr.bf16.gmra.mxu0 %v921
        %v1093 = vpop.f32.mrf.mxu0
        %v1094 = vadd.f32 0.0, %v1093
        %v1095 = vpop.f32.mrf.mxu0
        %v1096 = vadd.f32 0.0, %v1095
        %v1097 = vpop.f32.mrf.mxu0
        %v1098 = vadd.f32 0.0, %v1097
        %v1099 = vpop.f32.mrf.mxu0
        %v1100 = vadd.f32 0.0, %v1099
        %1101 = vmatprep.mubr.bf16.mxu0 0
        %1102 = vmatmul.mubr.bf16.gmra.mxu0 %v924
        %v1103 = vpop.f32.mrf.mxu0
        %v1104 = vadd.f32 0.0, %v1103
        %v1105 = vpop.f32.mrf.mxu0
        %v1106 = vadd.f32 0.0, %v1105
        %v1107 = vpop.f32.mrf.mxu0
        %v1108 = vadd.f32 0.0, %v1107
        %v1109 = vpop.f32.mrf.mxu0
        %v1110 = vadd.f32 0.0, %v1109
        %1111 = vmatprep.mubr.bf16.mxu0 0
        %1112 = vmatmul.mubr.bf16.gmra.mxu0 %v927
        %v1113 = vpop.f32.mrf.mxu0
        %v1114 = vadd.f32 0.0, %v1113
        %v1115 = vpop.f32.mrf.mxu0
        %v1116 = vadd.f32 0.0, %v1115
        %v1117 = vpop.f32.mrf.mxu0
        %v1118 = vadd.f32 0.0, %v1117
        %v1119 = vpop.f32.mrf.mxu0
        %v1120 = vadd.f32 0.0, %v1119
        %1121 = vdwg.mxu0
        %v1122 = vmul.f32 %v599, %v964
        %v1123 = vmul.f32 %v601, %v966
        %v1124 = vmul.f32 %v603, %v968
        %v1125 = vmul.f32 %v605, %v970
        %v1126 = vmul.f32 %v609, %v974
        %v1127 = vmul.f32 %v611, %v976
        %v1128 = vmul.f32 %v613, %v978
        %v1129 = vmul.f32 %v615, %v980
        %v1130 = vmul.f32 %v619, %v984
        %v1131 = vmul.f32 %v621, %v986
        %v1132 = vmul.f32 %v623, %v988
        %v1133 = vmul.f32 %v625, %v990
        %v1134 = vmul.f32 %v629, %v994
        %v1135 = vmul.f32 %v631, %v996
        %v1136 = vmul.f32 %v633, %v998
        %v1137 = vmul.f32 %v635, %v1000
        %v1138 = vmul.f32 %v639, %v1004
        %v1139 = vmul.f32 %v641, %v1006
        %v1140 = vmul.f32 %v643, %v1008
        %v1141 = vmul.f32 %v645, %v1010
        %v1142 = vmul.f32 %v649, %v1014
        %v1143 = vmul.f32 %v651, %v1016
        %v1144 = vmul.f32 %v653, %v1018
        %v1145 = vmul.f32 %v655, %v1020
        %v1146 = vmul.f32 %v659, %v1024
        %v1147 = vmul.f32 %v661, %v1026
        %v1148 = vmul.f32 %v663, %v1028
        %v1149 = vmul.f32 %v665, %v1030
        %v1150 = vmul.f32 %v669, %v1034
        %v1151 = vmul.f32 %v671, %v1036
        %v1152 = vmul.f32 %v673, %v1038
        %v1153 = vmul.f32 %v675, %v1040
        %v1154 = vmul.f32 %v679, %v1044
        %v1155 = vmul.f32 %v681, %v1046
        %v1156 = vmul.f32 %v683, %v1048
        %v1157 = vmul.f32 %v685, %v1050
        %v1158 = vmul.f32 %v689, %v1054
        %v1159 = vmul.f32 %v691, %v1056
        %v1160 = vmul.f32 %v693, %v1058
        %v1161 = vmul.f32 %v695, %v1060
        %v1162 = vmul.f32 %v699, %v1064
        %v1163 = vmul.f32 %v701, %v1066
        %v1164 = vmul.f32 %v703, %v1068
        %v1165 = vmul.f32 %v705, %v1070
        %v1166 = vmul.f32 %v709, %v1074
        %v1167 = vmul.f32 %v711, %v1076
        %v1168 = vmul.f32 %v713, %v1078
        %v1169 = vmul.f32 %v715, %v1080
        %v1170 = vmul.f32 %v719, %v1084
        %v1171 = vmul.f32 %v721, %v1086
        %v1172 = vmul.f32 %v723, %v1088
        %v1173 = vmul.f32 %v725, %v1090
        %v1174 = vmul.f32 %v729, %v1094
        %v1175 = vmul.f32 %v731, %v1096
        %v1176 = vmul.f32 %v733, %v1098
        %v1177 = vmul.f32 %v735, %v1100
        %v1178 = vmul.f32 %v739, %v1104
        %v1179 = vmul.f32 %v741, %v1106
        %v1180 = vmul.f32 %v743, %v1108
        %v1181 = vmul.f32 %v745, %v1110
        %v1182 = vmul.f32 %v749, %v1114
        %v1183 = vmul.f32 %v751, %v1116
        %v1184 = vmul.f32 %v753, %v1118
        %v1185 = vmul.f32 %v755, %v1120
        %v1186 = vpack.c.bf16 %v1124, %v1122
        %v1187 = vpack.c.bf16 %v1125, %v1123
        %v1188 = vpack.c.bf16 %v1128, %v1126
        %v1189 = vpack.c.bf16 %v1129, %v1127
        %v1190 = vpack.c.bf16 %v1132, %v1130
        %v1191 = vpack.c.bf16 %v1133, %v1131
        %v1192 = vpack.c.bf16 %v1136, %v1134
        %v1193 = vpack.c.bf16 %v1137, %v1135
        %v1194 = vpack.c.bf16 %v1140, %v1138
        %v1195 = vpack.c.bf16 %v1141, %v1139
        %v1196 = vpack.c.bf16 %v1144, %v1142
        %v1197 = vpack.c.bf16 %v1145, %v1143
        %v1198 = vpack.c.bf16 %v1148, %v1146
        %v1199 = vpack.c.bf16 %v1149, %v1147
        %v1200 = vpack.c.bf16 %v1152, %v1150
        %v1201 = vpack.c.bf16 %v1153, %v1151
        %v1202 = vpack.c.bf16 %v1156, %v1154
        %v1203 = vpack.c.bf16 %v1157, %v1155
        %v1204 = vpack.c.bf16 %v1160, %v1158
        %v1205 = vpack.c.bf16 %v1161, %v1159
        %v1206 = vpack.c.bf16 %v1164, %v1162
        %v1207 = vpack.c.bf16 %v1165, %v1163
        %v1208 = vpack.c.bf16 %v1168, %v1166
        %v1209 = vpack.c.bf16 %v1169, %v1167
        %v1210 = vpack.c.bf16 %v1172, %v1170
        %v1211 = vpack.c.bf16 %v1173, %v1171
        %v1212 = vpack.c.bf16 %v1176, %v1174
        %v1213 = vpack.c.bf16 %v1177, %v1175
        %v1214 = vpack.c.bf16 %v1180, %v1178
        %v1215 = vpack.c.bf16 %v1181, %v1179
        %v1216 = vpack.c.bf16 %v1184, %v1182
        %v1217 = vpack.c.bf16 %v1185, %v1183
        %v1218 = vld [vmem:[#allocation2] sm:$0xff]
        %v1219 = vld [vmem:[#allocation2 + $0x8] sm:$0xff]
        %v1220 = vld [vmem:[#allocation2 + $0x10] sm:$0xff]
        %v1221 = vld [vmem:[#allocation2 + $0x18] sm:$0xff]
        %v1222 = vld [vmem:[#allocation2 + $0x20] sm:$0xff]
        %v1223 = vld [vmem:[#allocation2 + $0x28] sm:$0xff]
        %v1224 = vld [vmem:[#allocation2 + $0x30] sm:$0xff]
        %v1225 = vld [vmem:[#allocation2 + $0x38] sm:$0xff]
        %v1226 = vld [vmem:[#allocation2 + $0x40] sm:$0xff]
        %v1227 = vld [vmem:[#allocation2 + $0x48] sm:$0xff]
        %v1228 = vld [vmem:[#allocation2 + $0x50] sm:$0xff]
        %v1229 = vld [vmem:[#allocation2 + $0x58] sm:$0xff]
        %v1230 = vld [vmem:[#allocation2 + $0x60] sm:$0xff]
        %v1231 = vld [vmem:[#allocation2 + $0x68] sm:$0xff]
        %v1232 = vld [vmem:[#allocation2 + $0x70] sm:$0xff]
        %v1233 = vld [vmem:[#allocation2 + $0x78] sm:$0xff]
        %v1234 = vld [vmem:[#allocation2 + $0x80] sm:$0xff]
        %v1235 = vld [vmem:[#allocation2 + $0x88] sm:$0xff]
        %v1236 = vld [vmem:[#allocation2 + $0x90] sm:$0xff]
        %v1237 = vld [vmem:[#allocation2 + $0x98] sm:$0xff]
        %v1238 = vld [vmem:[#allocation2 + $0xa0] sm:$0xff]
        %v1239 = vld [vmem:[#allocation2 + $0xa8] sm:$0xff]
        %v1240 = vld [vmem:[#allocation2 + $0xb0] sm:$0xff]
        %v1241 = vld [vmem:[#allocation2 + $0xb8] sm:$0xff]
        %v1242 = vld [vmem:[#allocation2 + $0xc0] sm:$0xff]
        %v1243 = vld [vmem:[#allocation2 + $0xc8] sm:$0xff]
        %v1244 = vld [vmem:[#allocation2 + $0xd0] sm:$0xff]
        %v1245 = vld [vmem:[#allocation2 + $0xd8] sm:$0xff]
        %v1246 = vld [vmem:[#allocation2 + $0xe0] sm:$0xff]
        %v1247 = vld [vmem:[#allocation2 + $0xe8] sm:$0xff]
        %v1248 = vld [vmem:[#allocation2 + $0xf0] sm:$0xff]
        %v1249 = vld [vmem:[#allocation2 + $0xf8] sm:$0xff]
        %v1250 = vld [vmem:[%s350] sm:$0xf]
        %v1251 = vld [vmem:[%s350 + $0x4] sm:$0xf]
        %v1252 = vld [vmem:[%s350 + $0x8] sm:$0xf]
        %v1253 = vld [vmem:[%s350 + $0xc] sm:$0xf]
        %v1254 = vld [vmem:[%s350 + $0x10] sm:$0xf]
        %v1255 = vld [vmem:[%s350 + $0x14] sm:$0xf]
        %v1256 = vld [vmem:[%s350 + $0x18] sm:$0xf]
        %v1257 = vld [vmem:[%s350 + $0x1c] sm:$0xf]
        %v1258 = vld [vmem:[%s350 + $0x20] sm:$0xf]
        %v1259 = vld [vmem:[%s350 + $0x24] sm:$0xf]
        %v1260 = vld [vmem:[%s350 + $0x28] sm:$0xf]
        %v1261 = vld [vmem:[%s350 + $0x2c] sm:$0xf]
        %v1262 = vld [vmem:[%s350 + $0x30] sm:$0xf]
        %v1263 = vld [vmem:[%s350 + $0x34] sm:$0xf]
        %v1264 = vld [vmem:[%s350 + $0x38] sm:$0xf]
        %v1265 = vld [vmem:[%s350 + $0x3c] sm:$0xf]
        %v1266 = vld [vmem:[%s350 + $0x40] sm:$0xf]
        %v1267 = vld [vmem:[%s350 + $0x44] sm:$0xf]
        %v1268 = vld [vmem:[%s350 + $0x48] sm:$0xf]
        %v1269 = vld [vmem:[%s350 + $0x4c] sm:$0xf]
        %v1270 = vld [vmem:[%s350 + $0x50] sm:$0xf]
        %v1271 = vld [vmem:[%s350 + $0x54] sm:$0xf]
        %v1272 = vld [vmem:[%s350 + $0x58] sm:$0xf]
        %v1273 = vld [vmem:[%s350 + $0x5c] sm:$0xf]
        %v1274 = vld [vmem:[%s350 + $0x60] sm:$0xf]
        %v1275 = vld [vmem:[%s350 + $0x64] sm:$0xf]
        %v1276 = vld [vmem:[%s350 + $0x68] sm:$0xf]
        %v1277 = vld [vmem:[%s350 + $0x6c] sm:$0xf]
        %v1278 = vld [vmem:[%s350 + $0x70] sm:$0xf]
        %v1279 = vld [vmem:[%s350 + $0x74] sm:$0xf]
        %v1280 = vld [vmem:[%s350 + $0x78] sm:$0xf]
        %v1281 = vld [vmem:[%s350 + $0x7c] sm:$0xf]
        %v1314 = vunpack.c.l.b16 %v1250
        %v1315 = vunpack.c.l.b16 %v1251
        %v1316 = vunpack.c.l.b16 %v1252
        %v1317 = vunpack.c.l.b16 %v1253
        %v1318 = vunpack.c.l.b16 %v1254
        %v1319 = vunpack.c.l.b16 %v1255
        %v1320 = vunpack.c.l.b16 %v1256
        %v1321 = vunpack.c.l.b16 %v1257
        %v1322 = vunpack.c.l.b16 %v1258
        %v1323 = vunpack.c.l.b16 %v1259
        %v1324 = vunpack.c.l.b16 %v1260
        %v1325 = vunpack.c.l.b16 %v1261
        %v1326 = vunpack.c.l.b16 %v1262
        %v1327 = vunpack.c.l.b16 %v1263
        %v1328 = vunpack.c.l.b16 %v1264
        %v1329 = vunpack.c.l.b16 %v1265
        %v1330 = vunpack.c.l.b16 %v1266
        %v1331 = vunpack.c.l.b16 %v1267
        %v1332 = vunpack.c.l.b16 %v1268
        %v1333 = vunpack.c.l.b16 %v1269
        %v1334 = vunpack.c.l.b16 %v1270
        %v1335 = vunpack.c.l.b16 %v1271
        %v1336 = vunpack.c.l.b16 %v1272
        %v1337 = vunpack.c.l.b16 %v1273
        %v1338 = vunpack.c.l.b16 %v1274
        %v1339 = vunpack.c.l.b16 %v1275
        %v1340 = vunpack.c.l.b16 %v1276
        %v1341 = vunpack.c.l.b16 %v1277
        %v1342 = vunpack.c.l.b16 %v1278
        %v1343 = vunpack.c.l.b16 %v1279
        %v1344 = vunpack.c.l.b16 %v1280
        %v1345 = vunpack.c.l.b16 %v1281
        %v1346 = vpack.c.b16 %v1315, %v1314
        %v1347 = vpack.c.b16 %v1317, %v1316
        %v1348 = vpack.c.b16 %v1319, %v1318
        %v1349 = vpack.c.b16 %v1321, %v1320
        %v1350 = vpack.c.b16 %v1323, %v1322
        %v1351 = vpack.c.b16 %v1325, %v1324
        %v1352 = vpack.c.b16 %v1327, %v1326
        %v1353 = vpack.c.b16 %v1329, %v1328
        %v1354 = vpack.c.b16 %v1331, %v1330
        %v1355 = vpack.c.b16 %v1333, %v1332
        %v1356 = vpack.c.b16 %v1335, %v1334
        %v1357 = vpack.c.b16 %v1337, %v1336
        %v1358 = vpack.c.b16 %v1339, %v1338
        %v1359 = vpack.c.b16 %v1341, %v1340
        %v1360 = vpack.c.b16 %v1343, %v1342
        %v1361 = vpack.c.b16 %v1345, %v1344
        %1378 = vmatprep.subr.bf16.mxu0 0
        %1379 = vmatpush1.bf16.msra.mxu0 %v1353
        %1380 = vmatprep.subr.bf16.mxu0 0
        %1381 = vmatpush1.bf16.msra.mxu0 %v1352
        %1382 = vmatprep.subr.bf16.mxu0 0
        %1383 = vmatpush1.bf16.msra.mxu0 %v1351
        %1384 = vmatprep.subr.bf16.mxu0 0
        %1385 = vmatpush1.bf16.msra.mxu0 %v1350
        %1386 = vmatprep.subr.bf16.mxu0 0
        %1387 = vmatpush1.bf16.msra.mxu0 %v1349
        %1388 = vmatprep.subr.bf16.mxu0 0
        %1389 = vmatpush1.bf16.msra.mxu0 %v1348
        %1390 = vmatprep.subr.bf16.mxu0 0
        %1391 = vmatpush1.bf16.msra.mxu0 %v1347
        %1392 = vmatprep.subr.bf16.mxu0 0
        %1393 = vmatpush1.bf16.msra.mxu0 %v1346
        %1394 = vmatprep.subr.bf16.mxu0 0
        %1395 = vmatpush2.bf16.msra.mxu0 %v1361
        %1396 = vmatprep.subr.bf16.mxu0 0
        %1397 = vmatpush2.bf16.msra.mxu0 %v1360
        %1398 = vmatprep.subr.bf16.mxu0 0
        %1399 = vmatpush2.bf16.msra.mxu0 %v1359
        %1400 = vmatprep.subr.bf16.mxu0 0
        %1401 = vmatpush2.bf16.msra.mxu0 %v1358
        %1402 = vmatprep.subr.bf16.mxu0 0
        %1403 = vmatpush2.bf16.msra.mxu0 %v1357
        %1404 = vmatprep.subr.bf16.mxu0 0
        %1405 = vmatpush2.bf16.msra.mxu0 %v1356
        %1406 = vmatprep.subr.bf16.mxu0 0
        %1407 = vmatpush2.bf16.msra.mxu0 %v1355
        %1408 = vmatprep.subr.bf16.mxu0 0
        %1409 = vmatpush2.bf16.msra.mxu0 %v1354
        %1410 = vmatprep.mubr.bf16.mxu0 %v1187
        %1411 = vmatmul.mubr.bf16.gmra.mxu0 %v1186
        %v1412 = vpop.f32.mrf.mxu0
        %v1413 = vadd.f32 0.0, %v1412
        %v1414 = vpop.f32.mrf.mxu0
        %v1415 = vpop.f32.mrf.mxu0
        %v1416 = vadd.f32 0.0, %v1415
        %v1417 = vpop.f32.mrf.mxu0
        %1418 = vmatprep.mubr.bf16.mxu0 %v1189
        %1419 = vmatmul.mubr.bf16.gmra.mxu0 %v1188
        %v1420 = vpop.f32.mrf.mxu0
        %v1421 = vadd.f32 0.0, %v1420
        %v1422 = vpop.f32.mrf.mxu0
        %v1423 = vpop.f32.mrf.mxu0
        %v1424 = vadd.f32 0.0, %v1423
        %v1425 = vpop.f32.mrf.mxu0
        %1426 = vmatprep.mubr.bf16.mxu0 %v1191
        %1427 = vmatmul.mubr.bf16.gmra.mxu0 %v1190
        %v1428 = vpop.f32.mrf.mxu0
        %v1429 = vadd.f32 0.0, %v1428
        %v1430 = vpop.f32.mrf.mxu0
        %v1431 = vpop.f32.mrf.mxu0
        %v1432 = vadd.f32 0.0, %v1431
        %v1433 = vpop.f32.mrf.mxu0
        %1434 = vmatprep.mubr.bf16.mxu0 %v1193
        %1435 = vmatmul.mubr.bf16.gmra.mxu0 %v1192
        %v1436 = vpop.f32.mrf.mxu0
        %v1437 = vadd.f32 0.0, %v1436
        %v1438 = vpop.f32.mrf.mxu0
        %v1439 = vpop.f32.mrf.mxu0
        %v1440 = vadd.f32 0.0, %v1439
        %v1441 = vpop.f32.mrf.mxu0
        %1442 = vmatprep.mubr.bf16.mxu0 %v1195
        %1443 = vmatmul.mubr.bf16.gmra.mxu0 %v1194
        %v1444 = vpop.f32.mrf.mxu0
        %v1445 = vadd.f32 0.0, %v1444
        %v1446 = vpop.f32.mrf.mxu0
        %v1447 = vpop.f32.mrf.mxu0
        %v1448 = vadd.f32 0.0, %v1447
        %v1449 = vpop.f32.mrf.mxu0
        %1450 = vmatprep.mubr.bf16.mxu0 %v1197
        %1451 = vmatmul.mubr.bf16.gmra.mxu0 %v1196
        %v1452 = vpop.f32.mrf.mxu0
        %v1453 = vadd.f32 0.0, %v1452
        %v1454 = vpop.f32.mrf.mxu0
        %v1455 = vpop.f32.mrf.mxu0
        %v1456 = vadd.f32 0.0, %v1455
        %v1457 = vpop.f32.mrf.mxu0
        %1458 = vmatprep.mubr.bf16.mxu0 %v1199
        %1459 = vmatmul.mubr.bf16.gmra.mxu0 %v1198
        %v1460 = vpop.f32.mrf.mxu0
        %v1461 = vadd.f32 0.0, %v1460
        %v1462 = vpop.f32.mrf.mxu0
        %v1463 = vpop.f32.mrf.mxu0
        %v1464 = vadd.f32 0.0, %v1463
        %v1465 = vpop.f32.mrf.mxu0
        %1466 = vmatprep.mubr.bf16.mxu0 %v1201
        %1467 = vmatmul.mubr.bf16.gmra.mxu0 %v1200
        %v1468 = vpop.f32.mrf.mxu0
        %v1469 = vadd.f32 0.0, %v1468
        %v1470 = vpop.f32.mrf.mxu0
        %v1471 = vpop.f32.mrf.mxu0
        %v1472 = vadd.f32 0.0, %v1471
        %v1473 = vpop.f32.mrf.mxu0
        %1474 = vmatprep.mubr.bf16.mxu0 %v1203
        %1475 = vmatmul.mubr.bf16.gmra.mxu0 %v1202
        %v1476 = vpop.f32.mrf.mxu0
        %v1477 = vadd.f32 0.0, %v1476
        %v1478 = vpop.f32.mrf.mxu0
        %v1479 = vpop.f32.mrf.mxu0
        %v1480 = vadd.f32 0.0, %v1479
        %v1481 = vpop.f32.mrf.mxu0
        %1482 = vmatprep.mubr.bf16.mxu0 %v1205
        %1483 = vmatmul.mubr.bf16.gmra.mxu0 %v1204
        %v1484 = vpop.f32.mrf.mxu0
        %v1485 = vadd.f32 0.0, %v1484
        %v1486 = vpop.f32.mrf.mxu0
        %v1487 = vpop.f32.mrf.mxu0
        %v1488 = vadd.f32 0.0, %v1487
        %v1489 = vpop.f32.mrf.mxu0
        %1490 = vmatprep.mubr.bf16.mxu0 %v1207
        %1491 = vmatmul.mubr.bf16.gmra.mxu0 %v1206
        %v1492 = vpop.f32.mrf.mxu0
        %v1493 = vadd.f32 0.0, %v1492
        %v1494 = vpop.f32.mrf.mxu0
        %v1495 = vpop.f32.mrf.mxu0
        %v1496 = vadd.f32 0.0, %v1495
        %v1497 = vpop.f32.mrf.mxu0
        %1498 = vmatprep.mubr.bf16.mxu0 %v1209
        %1499 = vmatmul.mubr.bf16.gmra.mxu0 %v1208
        %v1500 = vpop.f32.mrf.mxu0
        %v1501 = vadd.f32 0.0, %v1500
        %v1502 = vpop.f32.mrf.mxu0
        %v1503 = vpop.f32.mrf.mxu0
        %v1504 = vadd.f32 0.0, %v1503
        %v1505 = vpop.f32.mrf.mxu0
        %1506 = vmatprep.mubr.bf16.mxu0 %v1211
        %1507 = vmatmul.mubr.bf16.gmra.mxu0 %v1210
        %v1508 = vpop.f32.mrf.mxu0
        %v1509 = vadd.f32 0.0, %v1508
        %v1510 = vpop.f32.mrf.mxu0
        %v1511 = vpop.f32.mrf.mxu0
        %v1512 = vadd.f32 0.0, %v1511
        %v1513 = vpop.f32.mrf.mxu0
        %1514 = vmatprep.mubr.bf16.mxu0 %v1213
        %1515 = vmatmul.mubr.bf16.gmra.mxu0 %v1212
        %v1516 = vpop.f32.mrf.mxu0
        %v1517 = vadd.f32 0.0, %v1516
        %v1518 = vpop.f32.mrf.mxu0
        %v1519 = vpop.f32.mrf.mxu0
        %v1520 = vadd.f32 0.0, %v1519
        %v1521 = vpop.f32.mrf.mxu0
        %1522 = vmatprep.mubr.bf16.mxu0 %v1215
        %1523 = vmatmul.mubr.bf16.gmra.mxu0 %v1214
        %v1524 = vpop.f32.mrf.mxu0
        %v1525 = vadd.f32 0.0, %v1524
        %v1526 = vpop.f32.mrf.mxu0
        %v1527 = vpop.f32.mrf.mxu0
        %v1528 = vadd.f32 0.0, %v1527
        %v1529 = vpop.f32.mrf.mxu0
        %1530 = vmatprep.mubr.bf16.mxu0 %v1217
        %1531 = vmatmul.mubr.bf16.gmra.mxu0 %v1216
        %v1532 = vpop.f32.mrf.mxu0
        %v1533 = vadd.f32 0.0, %v1532
        %v1534 = vpop.f32.mrf.mxu0
        %v1535 = vpop.f32.mrf.mxu0
        %v1536 = vadd.f32 0.0, %v1535
        %v1537 = vpop.f32.mrf.mxu0
        %1538 = vdwg.mxu0
        %v1539 = vadd.f32 %v1218, %v1413
        %v1540 = vadd.f32 %v1219, %v1416
        %v1541 = vadd.f32 %v1220, %v1421
        %v1542 = vadd.f32 %v1221, %v1424
        %v1543 = vadd.f32 %v1222, %v1429
        %v1544 = vadd.f32 %v1223, %v1432
        %v1545 = vadd.f32 %v1224, %v1437
        %v1546 = vadd.f32 %v1225, %v1440
        %v1547 = vadd.f32 %v1226, %v1445
        %v1548 = vadd.f32 %v1227, %v1448
        %v1549 = vadd.f32 %v1228, %v1453
        %v1550 = vadd.f32 %v1229, %v1456
        %v1551 = vadd.f32 %v1230, %v1461
        %v1552 = vadd.f32 %v1231, %v1464
        %v1553 = vadd.f32 %v1232, %v1469
        %v1554 = vadd.f32 %v1233, %v1472
        %v1555 = vadd.f32 %v1234, %v1477
        %v1556 = vadd.f32 %v1235, %v1480
        %v1557 = vadd.f32 %v1236, %v1485
        %v1558 = vadd.f32 %v1237, %v1488
        %v1559 = vadd.f32 %v1238, %v1493
        %v1560 = vadd.f32 %v1239, %v1496
        %v1561 = vadd.f32 %v1240, %v1501
        %v1562 = vadd.f32 %v1241, %v1504
        %v1563 = vadd.f32 %v1242, %v1509
        %v1564 = vadd.f32 %v1243, %v1512
        %v1565 = vadd.f32 %v1244, %v1517
        %v1566 = vadd.f32 %v1245, %v1520
        %v1567 = vadd.f32 %v1246, %v1525
        %v1568 = vadd.f32 %v1247, %v1528
        %v1569 = vadd.f32 %v1248, %v1533
        %v1570 = vadd.f32 %v1249, %v1536
        %1571 = vst [vmem:[#allocation2] sm:$0xff] %v1539
        %1572 = vst [vmem:[#allocation2 + $0x8] sm:$0xff] %v1540
        %1573 = vst [vmem:[#allocation2 + $0x10] sm:$0xff] %v1541
        %1574 = vst [vmem:[#allocation2 + $0x18] sm:$0xff] %v1542
        %1575 = vst [vmem:[#allocation2 + $0x20] sm:$0xff] %v1543
        %1576 = vst [vmem:[#allocation2 + $0x28] sm:$0xff] %v1544
        %1577 = vst [vmem:[#allocation2 + $0x30] sm:$0xff] %v1545
        %1578 = vst [vmem:[#allocation2 + $0x38] sm:$0xff] %v1546
        %1579 = vst [vmem:[#allocation2 + $0x40] sm:$0xff] %v1547
        %1580 = vst [vmem:[#allocation2 + $0x48] sm:$0xff] %v1548
        %1581 = vst [vmem:[#allocation2 + $0x50] sm:$0xff] %v1549
        %1582 = vst [vmem:[#allocation2 + $0x58] sm:$0xff] %v1550
        %1583 = vst [vmem:[#allocation2 + $0x60] sm:$0xff] %v1551
        %1584 = vst [vmem:[#allocation2 + $0x68] sm:$0xff] %v1552
        %1585 = vst [vmem:[#allocation2 + $0x70] sm:$0xff] %v1553
        %1586 = vst [vmem:[#allocation2 + $0x78] sm:$0xff] %v1554
        %1587 = vst [vmem:[#allocation2 + $0x80] sm:$0xff] %v1555
        %1588 = vst [vmem:[#allocation2 + $0x88] sm:$0xff] %v1556
        %1589 = vst [vmem:[#allocation2 + $0x90] sm:$0xff] %v1557
        %1590 = vst [vmem:[#allocation2 + $0x98] sm:$0xff] %v1558
        %1591 = vst [vmem:[#allocation2 + $0xa0] sm:$0xff] %v1559
        %1592 = vst [vmem:[#allocation2 + $0xa8] sm:$0xff] %v1560
        %1593 = vst [vmem:[#allocation2 + $0xb0] sm:$0xff] %v1561
        %1594 = vst [vmem:[#allocation2 + $0xb8] sm:$0xff] %v1562
        %1595 = vst [vmem:[#allocation2 + $0xc0] sm:$0xff] %v1563
        %1596 = vst [vmem:[#allocation2 + $0xc8] sm:$0xff] %v1564
        %1597 = vst [vmem:[#allocation2 + $0xd0] sm:$0xff] %v1565
        %1598 = vst [vmem:[#allocation2 + $0xd8] sm:$0xff] %v1566
        %1599 = vst [vmem:[#allocation2 + $0xe0] sm:$0xff] %v1567
        %1600 = vst [vmem:[#allocation2 + $0xe8] sm:$0xff] %v1568
        %1601 = vst [vmem:[#allocation2 + $0xf0] sm:$0xff] %v1569
        %1602 = vst [vmem:[#allocation2 + $0xf8] sm:$0xff] %v1570
        // Predicated region
        $region45: #{tpu_custom_call.1} parent=39 // pred_check
          %p1603 = pneg %p355
        $region46: #{tpu_custom_call.1} parent=39 // pred_check_branch
          %1605 = sbr.rel (%p1603) target = $region48
        $region47: #{tpu_custom_call.1} parent=39 // pred_region
          %v1606 = vld [vmem:[#allocation2] sm:$0xff]
          %v1607 = vld [vmem:[#allocation2 + $0x8] sm:$0xff]
          %v1608 = vld [vmem:[#allocation2 + $0x10] sm:$0xff]
          %v1609 = vld [vmem:[#allocation2 + $0x18] sm:$0xff]
          %v1610 = vld [vmem:[#allocation2 + $0x20] sm:$0xff]
          %v1611 = vld [vmem:[#allocation2 + $0x28] sm:$0xff]
          %v1612 = vld [vmem:[#allocation2 + $0x30] sm:$0xff]
          %v1613 = vld [vmem:[#allocation2 + $0x38] sm:$0xff]
          %v1614 = vld [vmem:[#allocation2 + $0x40] sm:$0xff]
          %v1615 = vld [vmem:[#allocation2 + $0x48] sm:$0xff]
          %v1616 = vld [vmem:[#allocation2 + $0x50] sm:$0xff]
          %v1617 = vld [vmem:[#allocation2 + $0x58] sm:$0xff]
          %v1618 = vld [vmem:[#allocation2 + $0x60] sm:$0xff]
          %v1619 = vld [vmem:[#allocation2 + $0x68] sm:$0xff]
          %v1620 = vld [vmem:[#allocation2 + $0x70] sm:$0xff]
          %v1621 = vld [vmem:[#allocation2 + $0x78] sm:$0xff]
          %v1622 = vld [vmem:[#allocation2 + $0x80] sm:$0xff]
          %v1623 = vld [vmem:[#allocation2 + $0x88] sm:$0xff]
          %v1624 = vld [vmem:[#allocation2 + $0x90] sm:$0xff]
          %v1625 = vld [vmem:[#allocation2 + $0x98] sm:$0xff]
          %v1626 = vld [vmem:[#allocation2 + $0xa0] sm:$0xff]
          %v1627 = vld [vmem:[#allocation2 + $0xa8] sm:$0xff]
          %v1628 = vld [vmem:[#allocation2 + $0xb0] sm:$0xff]
          %v1629 = vld [vmem:[#allocation2 + $0xb8] sm:$0xff]
          %v1630 = vld [vmem:[#allocation2 + $0xc0] sm:$0xff]
          %v1631 = vld [vmem:[#allocation2 + $0xc8] sm:$0xff]
          %v1632 = vld [vmem:[#allocation2 + $0xd0] sm:$0xff]
          %v1633 = vld [vmem:[#allocation2 + $0xd8] sm:$0xff]
          %v1634 = vld [vmem:[#allocation2 + $0xe0] sm:$0xff]
          %v1635 = vld [vmem:[#allocation2 + $0xe8] sm:$0xff]
          %v1636 = vld [vmem:[#allocation2 + $0xf0] sm:$0xff]
          %v1637 = vld [vmem:[#allocation2 + $0xf8] sm:$0xff]
          %v1638 = vpack.c.bf16 %v1607, %v1606
          %v1639 = vpack.c.bf16 %v1609, %v1608
          %v1640 = vpack.c.bf16 %v1611, %v1610
          %v1641 = vpack.c.bf16 %v1613, %v1612
          %v1642 = vpack.c.bf16 %v1615, %v1614
          %v1643 = vpack.c.bf16 %v1617, %v1616
          %v1644 = vpack.c.bf16 %v1619, %v1618
          %v1645 = vpack.c.bf16 %v1621, %v1620
          %v1646 = vpack.c.bf16 %v1623, %v1622
          %v1647 = vpack.c.bf16 %v1625, %v1624
          %v1648 = vpack.c.bf16 %v1627, %v1626
          %v1649 = vpack.c.bf16 %v1629, %v1628
          %v1650 = vpack.c.bf16 %v1631, %v1630
          %v1651 = vpack.c.bf16 %v1633, %v1632
          %v1652 = vpack.c.bf16 %v1635, %v1634
          %v1653 = vpack.c.bf16 %v1637, %v1636
          %v1670 = vunpack.c.l.b16 %v1638
          %v1671 = vunpack.c.h.b16 %v1638
          %v1672 = vunpack.c.l.b16 %v1639
          %v1673 = vunpack.c.h.b16 %v1639
          %v1674 = vunpack.c.l.b16 %v1640
          %v1675 = vunpack.c.h.b16 %v1640
          %v1676 = vunpack.c.l.b16 %v1641
          %v1677 = vunpack.c.h.b16 %v1641
          %v1678 = vunpack.c.l.b16 %v1642
          %v1679 = vunpack.c.h.b16 %v1642
          %v1680 = vunpack.c.l.b16 %v1643
          %v1681 = vunpack.c.h.b16 %v1643
          %v1682 = vunpack.c.l.b16 %v1644
          %v1683 = vunpack.c.h.b16 %v1644
          %v1684 = vunpack.c.l.b16 %v1645
          %v1685 = vunpack.c.h.b16 %v1645
          %v1686 = vunpack.c.l.b16 %v1646
          %v1687 = vunpack.c.h.b16 %v1646
          %v1688 = vunpack.c.l.b16 %v1647
          %v1689 = vunpack.c.h.b16 %v1647
          %v1690 = vunpack.c.l.b16 %v1648
          %v1691 = vunpack.c.h.b16 %v1648
          %v1692 = vunpack.c.l.b16 %v1649
          %v1693 = vunpack.c.h.b16 %v1649
          %v1694 = vunpack.c.l.b16 %v1650
          %v1695 = vunpack.c.h.b16 %v1650
          %v1696 = vunpack.c.l.b16 %v1651
          %v1697 = vunpack.c.h.b16 %v1651
          %v1698 = vunpack.c.l.b16 %v1652
          %v1699 = vunpack.c.h.b16 %v1652
          %v1700 = vunpack.c.l.b16 %v1653
          %v1701 = vunpack.c.h.b16 %v1653
          %v1702 = vpack.c.b16 %v1670, %v1670
          %v1703 = vpack.c.b16 %v1671, %v1671
          %v1704 = vpack.c.b16 %v1672, %v1672
          %v1705 = vpack.c.b16 %v1673, %v1673
          %v1706 = vpack.c.b16 %v1674, %v1674
          %v1707 = vpack.c.b16 %v1675, %v1675
          %v1708 = vpack.c.b16 %v1676, %v1676
          %v1709 = vpack.c.b16 %v1677, %v1677
          %v1710 = vpack.c.b16 %v1678, %v1678
          %v1711 = vpack.c.b16 %v1679, %v1679
          %v1712 = vpack.c.b16 %v1680, %v1680
          %v1713 = vpack.c.b16 %v1681, %v1681
          %v1714 = vpack.c.b16 %v1682, %v1682
          %v1715 = vpack.c.b16 %v1683, %v1683
          %v1716 = vpack.c.b16 %v1684, %v1684
          %v1717 = vpack.c.b16 %v1685, %v1685
          %v1718 = vpack.c.b16 %v1686, %v1686
          %v1719 = vpack.c.b16 %v1687, %v1687
          %v1720 = vpack.c.b16 %v1688, %v1688
          %v1721 = vpack.c.b16 %v1689, %v1689
          %v1722 = vpack.c.b16 %v1690, %v1690
          %v1723 = vpack.c.b16 %v1691, %v1691
          %v1724 = vpack.c.b16 %v1692, %v1692
          %v1725 = vpack.c.b16 %v1693, %v1693
          %v1726 = vpack.c.b16 %v1694, %v1694
          %v1727 = vpack.c.b16 %v1695, %v1695
          %v1728 = vpack.c.b16 %v1696, %v1696
          %v1729 = vpack.c.b16 %v1697, %v1697
          %v1730 = vpack.c.b16 %v1698, %v1698
          %v1731 = vpack.c.b16 %v1699, %v1699
          %v1732 = vpack.c.b16 %v1700, %v1700
          %v1733 = vpack.c.b16 %v1701, %v1701
          %1766 = vst [vmem:[%s316] sm:$0xf] %v1702
          %1767 = vst [vmem:[%s316 + $0x4] sm:$0xf] %v1703
          %1768 = vst [vmem:[%s316 + $0x8] sm:$0xf] %v1704
          %1769 = vst [vmem:[%s316 + $0xc] sm:$0xf] %v1705
          %1770 = vst [vmem:[%s316 + $0x10] sm:$0xf] %v1706
          %1771 = vst [vmem:[%s316 + $0x14] sm:$0xf] %v1707
          %1772 = vst [vmem:[%s316 + $0x18] sm:$0xf] %v1708
          %1773 = vst [vmem:[%s316 + $0x1c] sm:$0xf] %v1709
          %1774 = vst [vmem:[%s316 + $0x20] sm:$0xf] %v1710
          %1775 = vst [vmem:[%s316 + $0x24] sm:$0xf] %v1711
          %1776 = vst [vmem:[%s316 + $0x28] sm:$0xf] %v1712
          %1777 = vst [vmem:[%s316 + $0x2c] sm:$0xf] %v1713
          %1778 = vst [vmem:[%s316 + $0x30] sm:$0xf] %v1714
          %1779 = vst [vmem:[%s316 + $0x34] sm:$0xf] %v1715
          %1780 = vst [vmem:[%s316 + $0x38] sm:$0xf] %v1716
          %1781 = vst [vmem:[%s316 + $0x3c] sm:$0xf] %v1717
          %1782 = vst [vmem:[%s316 + $0x40] sm:$0xf] %v1718
          %1783 = vst [vmem:[%s316 + $0x44] sm:$0xf] %v1719
          %1784 = vst [vmem:[%s316 + $0x48] sm:$0xf] %v1720
          %1785 = vst [vmem:[%s316 + $0x4c] sm:$0xf] %v1721
          %1786 = vst [vmem:[%s316 + $0x50] sm:$0xf] %v1722
          %1787 = vst [vmem:[%s316 + $0x54] sm:$0xf] %v1723
          %1788 = vst [vmem:[%s316 + $0x58] sm:$0xf] %v1724
          %1789 = vst [vmem:[%s316 + $0x5c] sm:$0xf] %v1725
          %1790 = vst [vmem:[%s316 + $0x60] sm:$0xf] %v1726
          %1791 = vst [vmem:[%s316 + $0x64] sm:$0xf] %v1727
          %1792 = vst [vmem:[%s316 + $0x68] sm:$0xf] %v1728
          %1793 = vst [vmem:[%s316 + $0x6c] sm:$0xf] %v1729
          %1794 = vst [vmem:[%s316 + $0x70] sm:$0xf] %v1730
          %1795 = vst [vmem:[%s316 + $0x74] sm:$0xf] %v1731
          %1796 = vst [vmem:[%s316 + $0x78] sm:$0xf] %v1732
          %1797 = vst [vmem:[%s316 + $0x7c] sm:$0xf] %v1733
        $region48: #{tpu_custom_call.1} parent=39 // pred_fallthru
          _
        %s1798 = sand.u32 %s180, 1
        %s1799 = scalar_lea.sflag [#allocation6], %s1798
        %s1800 = sand.u32 %s180, 1
        %s1801 = smul.addr %s1800, 128
        %s1802 = scalar_lea.vmem [#allocation5], %s1801
        // Predicated region
        $region49: #{tpu_custom_call.1} parent=39 // pred_check
          %p1803 = pneg %p190
        $region50: #{tpu_custom_call.1} parent=39 // pred_check_branch
          %1805 = sbr.rel (%p1803) target = $region52
        $region51: #{tpu_custom_call.1} parent=39 // pred_region
          %s1806 = smul.u32 32, %s30
          %s1808 = ssub.s32 2048, 2048
          %1809 = vsyncadd %s1799, %s1808
          %s1810 = smul.addr %s1806, 64
          %s1811 = scalar_lea.hbm %s6, %s1810
          %s1812 = sshll.u32 %s1802, 4
          %s1813 = int_to_ptr.vmem [resolvable:$true] %s1812
          %1818 = dma.vmem_to_hbm [thread:$0]  %s1813, 2048, %s1811, %s1799, 64, 64, 4
        $region52: #{tpu_custom_call.1} parent=39 // pred_fallthru
          _
      $region40: #{tpu_custom_call.1} parent=5 // pred_fallthru
        _
      %p1819 = scmp.le.s32.totalorder 2, %s21
      // Predicated region
      $region53: #{tpu_custom_call.1} parent=5 // pred_check
        %p1820 = pneg %p1819
      $region54: #{tpu_custom_call.1} parent=5 // pred_check_branch
        %1822 = sbr.rel (%p1820) target = $region56
      $region55: #{tpu_custom_call.1} parent=5 // pred_region
        %s1823 = ssub.s32 %s21, 2
        // Predicated region
        $region57: #{tpu_custom_call.1} parent=55 // pred_check
          %p1824 = pneg %p196
        $region58: #{tpu_custom_call.1} parent=55 // pred_check_branch
          %1826 = sbr.rel (%p1824) target = $region60
        $region59: #{tpu_custom_call.1} parent=55 // pred_region
          %s1827 = sand.u32 %s181, 1
          %s1828 = scalar_lea.sflag [#allocation6], %s1827
          %s1829 = sand.u32 %s181, 1
          %s1830 = smul.addr %s1829, 128
          %s1831 = scalar_lea.vmem [#allocation5], %s1830
          %1832 = dma.done %s1828, 2048
        $region60: #{tpu_custom_call.1} parent=55 // pred_fallthru
          _
      $region56: #{tpu_custom_call.1} parent=5 // pred_fallthru
        _
    $region6: #{tpu_custom_call.1} parent=1 // loop_footer
      %s25 = sadd.s32 1, %s21
    $region7: #{tpu_custom_call.1} parent=1 // loop_footer_branch
      %20 = sbr.rel target = $region3
    $region8: #{tpu_custom_call.1} parent=1 // loop_exit
      _
    %1833 = vsyncpa [#allocation6], 1
    %s1834 = scalar_lea.sflag [#allocation6], 1
    %1835 = vsyncpa %s1834, 1

</llo_original>
